<compile_context>
chip_gen: v6e
topology: v6e:2x2x1
jax: 0.10.0
libtpu: 0.0.40
codegen_flags: <defaults>
</compile_context>

<pallas_src>
import math

import numpy as np
import jax
import jax.numpy as jnp
from jax import lax
from jax.experimental import pallas as pl
from jax.experimental.pallas import tpu as pltpu


def _vmem():
    return pl.BlockSpec(memory_space=pltpu.MemorySpace.VMEM)


def _smem():
    return pl.BlockSpec(memory_space=pltpu.MemorySpace.SMEM)


# --------------------------- fused Pallas kernel -----------------------------

def _fused_kernel(seed_ref, tg_ref, x1_ref, w1d_ref, w2d_ref, w1h_ref,
                  whd_ref, aux_ref, out_ref):
    f32 = jnp.float32
    bf16 = jnp.bfloat16

    aux = aux_ref[...]                                   # (16, 128) packed bias rows
    whd = whd_ref[...]                                   # (64, 72) packed head weights

    # ---- Gumbel noise first (scalar/VPU/EUP only) so the two logs overlap the
    #      MXU-heavy conv section; no XLA threefry on the host.
    k0 = seed_ref[0]
    k1 = seed_ref[1]
    lane4 = lax.broadcasted_iota(jnp.int32, (1, 4), 1)
    h = (lane4 + 1) * jnp.int32(-1640531527)             # 0x9E3779B9
    h = h + k0
    h = h ^ (h >> 16)
    h = h * jnp.int32(-2048144789)                       # 0x85EBCA6B
    h = h ^ k1
    h = h ^ (h >> 13)
    h = h * jnp.int32(-1028477387)                       # 0xC2B2AE35
    h = h ^ (h >> 16)
    rb = h & jnp.int32(0x7FFFFF)                         # 23 random bits / lane
    u = (rb.astype(f32) + 0.5) * f32(1.0 / (1 << 23))    # uniform in (0, 1)
    gumbel = -jnp.log(-jnp.log(u))                       # (1, 4)

    # ---- conv1 (4->32, k3, s2, valid) + ReLU + 2x2 maxpool -------------------
    # x1 (host im2col): row = 72*phase + 8*(i+1) + (j+1) for the 4 pool phases
    # and the 6x6 pooled grid (8-aligned strides); lane = 4*(3*kh+kw) + cin.
    y1 = jnp.dot(x1_ref[...], w1d_ref[...], preferred_element_type=f32)   # (288,32)
    y1 = jnp.maximum(y1 + aux[0:1, 0:32], 0.0)
    p1 = jnp.maximum(jnp.maximum(y1[0:72, :], y1[72:144, :]),
                     jnp.maximum(y1[144:216, :], y1[216:288, :]))         # (72,32)
    # zero the conv2 'same'-padding ring and the phase-pad rows
    ridx = lax.broadcasted_iota(jnp.int32, (72, 1), 0)
    rhi = ridx >> 3
    rlo = ridx & 7
    inside = ((rhi >= 1) & (rhi <= 6) & (rlo >= 1) & (rlo <= 6)).astype(f32)
    p1 = p1 * inside          # p1[8*(r+1)+(c+1), ch] = pool1[ch, r, c], 0 elsewhere

    # ---- conv2 (32->64, k3, s1, same): 9 accumulating matmuls, deduped weight
    # accumulator rows = 8*r + cc (cc = 6,7 are junk and never used downstream)
    acc2 = None
    for kh in range(3):
        for kw in range(3):
            t = 3 * kh + kw
            lhs = p1[8 * kh + kw: 8 * kh + kw + 48, :].astype(bf16)       # (48,32)
            d = jnp.dot(lhs, w2d_ref[32 * t: 32 * t + 32, :],
                        preferred_element_type=f32)
            acc2 = d if acc2 is None else acc2 + d
    y2 = jnp.maximum(acc2 + aux[1:2, 0:64], 0.0)                          # (48,64)
    # TODO(synk): Dropout(0.2) layers are eval-mode identity here (no train mask).

    # ---- 2x2 maxpool #2 ------------------------------------------------------
    A = jnp.maximum(y2[0:40, :], y2[8:48, :])            # max over row pair
    B = jnp.maximum(A[0:39, :], A[1:40, :])              # max over col pair
    # pool2[pr, pc, :] = B[16*pr + 2*pc, :]

    # ---- heads layer 1 (Flatten folded into w1h row order): 9 small dots -----
    h1 = None
    for s in range(9):
        pr, pc = s // 3, s % 3
        r0 = 16 * pr + 2 * pc
        row = B[r0:r0 + 1, :].astype(bf16)                                # (1,64)
        d = jnp.dot(row, w1h_ref[64 * s: 64 * s + 64, :],
                    preferred_element_type=f32)                           # (1,128)
        h1 = d if h1 is None else h1 + d

    tg = tg_ref[0]                                        # scalar: 1 - time_game
    h1a = jnp.maximum(h1[:, 0:64] + aux[2:3, 0:64] + tg * aux[3:4, 0:64], 0.0)
    h1c_base = h1[:, 64:128] + aux[4:5, 0:64] + tg * aux[6:7, 0:64]
    # critic layer-1 for all 4 candidate actions -> independent of the sampler
    a_col = lax.broadcasted_iota(jnp.int32, (4, 1), 0).astype(f32)        # (4,1)
    h1c_all = jnp.maximum(h1c_base + a_col * aux[5:6, 0:64], 0.0)         # (4,64)

    # ---- layers 2 & 3, actor and critic packed side by side in lanes ---------
    h1_all = jnp.concatenate([h1a, h1c_all], axis=0).astype(bf16)         # (5,64)
    h2_all = jnp.maximum(
        jnp.dot(h1_all, whd[:, 0:64], preferred_element_type=f32)
        + aux[7:8, 0:64], 0.0)                                            # (5,64)
    out3 = (jnp.dot(h2_all.astype(bf16), whd[:, 64:72],
                    preferred_element_type=f32) + aux[8:9, 0:8])          # (5,8)
    logits = out3[0:1, 0:4]                     # actor logits (row 0)
    values4 = out3[1:5, 4:5]                    # critic value per candidate action

    # ---- softmax / entropy (exact) / Gumbel-max sample ------------------------
    zmax = jnp.max(logits, axis=1, keepdims=True)
    logz = logits - zmax
    ez = jnp.exp(logz)
    se = jnp.sum(ez, axis=1, keepdims=True)
    lse = jnp.log(se)
    log_probs = logz - lse
    entropy = lse - jnp.sum(ez * logz, axis=1, keepdims=True) / se

    gz = log_probs + gumbel
    gmax = jnp.max(gz, axis=1, keepdims=True)
    lane4f = lane4.astype(f32)
    action_f = jnp.min(jnp.where(gz >= gmax, lane4f, f32(1e9)),
                       axis=1, keepdims=True)                             # (1,1)
    log_prob = jnp.sum(jnp.where(lane4f == action_f, log_probs, 0.0),
                       axis=1, keepdims=True)                             # (1,1)
    value = jnp.sum(jnp.where(a_col == action_f, values4, 0.0),
                    axis=0, keepdims=True)                                # (1,1)

    # single lane-dense writeback: [action, log_prob, value, entropy, 0, 0, 0, 0]
    out_ref[...] = jnp.concatenate(
        [action_f, log_prob, value, entropy, jnp.zeros((1, 4), f32)], axis=1)


def fused_forward(kp, seed, tg, x1):
    return pl.pallas_call(
        _fused_kernel,
        out_shape=jax.ShapeDtypeStruct((1, 8), jnp.float32),
        in_specs=[_smem(), _smem()] + [_vmem()] * 6,
        out_specs=_vmem(),
    )(seed, tg, x1, kp["w1d"], kp["w2d"], kp["w1h"], kp["whd"], kp["aux"])


# --------------------------- parameters (PyTorch layout) ---------------------

def init_params(key):
    ks = jax.random.split(key, 16)

    def kaiming_out(k, shape, fan_out):
        return jax.random.normal(k, shape, jnp.float32) * math.sqrt(2.0 / fan_out)

    def xavier_u(k, shape):          # shape = (out, in)
        limit = math.sqrt(6.0 / (shape[0] + shape[1]))
        return jax.random.uniform(k, shape, jnp.float32, -limit, limit)

    def default_u(k, shape, fan_in):  # PyTorch default Linear/Conv init
        bound = 1.0 / math.sqrt(fan_in)
        return jax.random.uniform(k, shape, jnp.float32, -bound, bound)

    return {
        "conv1_w": kaiming_out(ks[0], (32, 4, 3, 3), 32 * 9),
        "conv1_b": default_u(ks[1], (32,), 4 * 9),
        "conv2_w": kaiming_out(ks[2], (64, 32, 3, 3), 64 * 9),
        "conv2_b": default_u(ks[3], (64,), 32 * 9),
        "a_w1": xavier_u(ks[4], (64, 577)), "a_b1": default_u(ks[5], (64,), 577),
        "a_w2": default_u(ks[6], (32, 64), 64), "a_b2": default_u(ks[7], (32,), 64),
        "a_w3": default_u(ks[8], (4, 32), 32), "a_b3": default_u(ks[9], (4,), 32),
        "c_w1": xavier_u(ks[10], (64, 578)), "c_b1": default_u(ks[11], (64,), 578),
        "c_w2": default_u(ks[12], (32, 64), 64), "c_b2": default_u(ks[13], (32,), 64),
        "c_w3": default_u(ks[14], (1, 32), 32), "c_b3": default_u(ks[15], (1,), 32),
    }


# ------------------- one-time repack of weights for the kernel ---------------

def prepare_kernel_params(p):
    w1 = np.asarray(p["conv1_w"], np.float32)      # (32, 4, 3, 3)
    b1 = np.asarray(p["conv1_b"], np.float32)
    w2 = np.asarray(p["conv2_w"], np.float32)      # (64, 32, 3, 3)
    b2 = np.asarray(p["conv2_b"], np.float32)

    # deduped im2col weights: rows = tap-major, cin-minor; cols = cout
    w1d = w1.transpose(2, 3, 1, 0).reshape(36, 32)      # row = 4*(3kh+kw) + cin
    w2d = w2.transpose(2, 3, 1, 0).reshape(288, 64)     # row = 32*(3kh+kw) + cin

    # Flatten order (torch: c2*9 + pr*3 + pc) folded into head-weight row perm;
    # kernel feature index = 64*(3*pr+pc) + c2.
    perm = np.zeros(576, np.int64)
    for s in range(9):
        for c2 in range(64):
            perm[64 * s + c2] = c2 * 9 + s

    a1 = np.asarray(p["a_w1"], np.float32)         # (64, 577)
    c1 = np.asarray(p["c_w1"], np.float32)         # (64, 578)
    w1h = np.zeros((576, 128), np.float32)
    w1h[:, :64] = a1[:, :576][:, perm].T
    w1h[:, 64:] = c1[:, :576][:, perm].T

    # packed head weights: lanes 0:32 actor L2, 32:64 critic L2, 64:68 actor L3,
    # lane 68 critic L3 (zero elsewhere so the unused quadrants never leak).
    whd = np.zeros((64, 72), np.float32)
    whd[:, 0:32] = np.asarray(p["a_w2"], np.float32).T
    whd[:, 32:64] = np.asarray(p["c_w2"], np.float32).T
    whd[0:32, 64:68] = np.asarray(p["a_w3"], np.float32).T
    whd[32:64, 68:69] = np.asarray(p["c_w3"], np.float32).T

    # all small bias / row vectors packed into one (16,128) array (one DMA)
    aux = np.zeros((16, 128), np.float32)
    aux[0, 0:32] = b1
    aux[1, 0:64] = b2
    aux[2, 0:64] = np.asarray(p["a_b1"], np.float32)
    aux[3, 0:64] = a1[:, 576]                       # actor time weight
    aux[4, 0:64] = np.asarray(p["c_b1"], np.float32)
    aux[5, 0:64] = c1[:, 576]                       # critic action weight
    aux[6, 0:64] = c1[:, 577]                       # critic time weight
    aux[7, 0:32] = np.asarray(p["a_b2"], np.float32)
    aux[7, 32:64] = np.asarray(p["c_b2"], np.float32)
    aux[8, 0:4] = np.asarray(p["a_b3"], np.float32)
    aux[8, 4] = np.asarray(p["c_b3"], np.float32)[0]

    # conv1 im2col gather indices (into state.reshape(-1)); rows outside the
    # valid 6x6 grid are masked away inside the kernel, so their index is 0.
    x1_idx = np.zeros((288, 36), np.int32)
    for d in range(2):
        for e in range(2):
            ph = 2 * d + e
            for i in range(6):
                for j in range(6):
                    r = 72 * ph + 8 * (i + 1) + (j + 1)
                    for kh in range(3):
                        for kw in range(3):
                            for c in range(4):
                                lane = 4 * (3 * kh + kw) + c
                                s0 = 4 * j + 2 * e + kw     # state dim 0 (H)
                                s1 = 4 * i + 2 * d + kh     # state dim 1 (W)
                                x1_idx[r, lane] = (s0 * 28 + s1) * 4 + c

    jb = lambda a: jnp.asarray(a, jnp.bfloat16)
    jf = lambda a: jnp.asarray(a, jnp.float32)
    return {
        "w1d": jb(w1d), "w2d": jb(w2d), "w1h": jb(w1h), "whd": jb(whd),
        "aux": jf(aux), "x1_idx": jnp.asarray(x1_idx, jnp.int32),
    }


# --------------------------- host-side glue -----------------------------------

def _key_words(key):
    """Two raw 32-bit words of a JAX PRNG key (typed or legacy uint32[2])."""
    try:
        if jnp.issubdtype(key.dtype, jax.dtypes.prng_key):
            key = jax.random.key_data(key)
    except (AttributeError, TypeError):
        pass
    kd = jnp.asarray(key).reshape(-1)[:2].astype(jnp.uint32)
    return lax.bitcast_convert_type(kd, jnp.int32)


def forward(kparams, state_hwc, time_game, sample_key):
    # Host glue: conv1 im2col gather (folds torch's (0,3,2,1) transpose, the
    # stride-2/valid conv taps and the pool-phase layout); everything else runs
    # inside the single fused kernel.
    x = state_hwc.astype(jnp.float32).reshape(-1)
    x1 = jnp.take(x, kparams["x1_idx"]).astype(jnp.bfloat16)      # (288, 36)
    tg = jnp.reshape(1.0 - jnp.asarray(time_game, jnp.float32), (1,))
    seed = _key_words(sample_key)
    out = fused_forward(kparams, seed, tg, x1)                    # (1, 8)
    action = out[0, 0].astype(jnp.int32)
    log_prob = out[0, 1]
    value = out[0, 2].reshape(1, 1)
    entropy = out[0, 3]
    # TODO(synk): batching multiple environment states (and a "parallel" grid so
    # v7x's second TensorCore is used) would need a batched entry point; the
    # reference module's forward is inherently batch-1.
    return action, log_prob, value, entropy


# --------------------------- main ---------------------------------------------

if __name__ == "__main__":
    root = jax.random.PRNGKey(0)
    pkey, skey, akey = jax.random.split(root, 3)

    params = init_params(pkey)                      # PyTorch-layout weights
    kparams = prepare_kernel_params(params)         # one-time repack for kernel

    state = jax.random.uniform(skey, (28, 28, 4), jnp.float32)   # HWC, 4 channels
    time_game = 0.25

    fwd = jax.jit(forward)
    action, log_prob, value, entropy = fwd(kparams, state, time_game, akey)
    jax.block_until_ready((action, log_prob, value, entropy))

    assert value.shape == (1, 1)
    assert bool(jnp.isfinite(log_prob)) and bool(jnp.isfinite(entropy))
    assert bool(jnp.isfinite(value[0, 0]))
    a = int(action)
    assert 0 <= a < 4
    print("KERNEL_OK")
</pallas_src>

<mosaic_0001>
module attributes {stable_mosaic.version = 11 : i64} {
  func.func @_fused_kernel(%arg0: memref<2xi32, #tpu.memory_space<smem>>, %arg1: memref<1xf32, #tpu.memory_space<smem>>, %arg2: memref<288x36xbf16, #tpu.memory_space<vmem>>, %arg3: memref<36x32xbf16, #tpu.memory_space<vmem>>, %arg4: memref<288x64xbf16, #tpu.memory_space<vmem>>, %arg5: memref<576x128xbf16, #tpu.memory_space<vmem>>, %arg6: memref<64x72xbf16, #tpu.memory_space<vmem>>, %arg7: memref<16x128xf32, #tpu.memory_space<vmem>>, %arg8: memref<1x8xf32, #tpu.memory_space<vmem>>) attributes {dimension_semantics = [], scalar_prefetch = 0 : i64, scratch_operands = 0 : i64, tpu.core_type = #tpu.core_type<tc>} {
    %c0 = arith.constant 0 : index
    %c0_0 = arith.constant 0 : index
    %0 = vector.load %arg7[%c0, %c0_0] : memref<16x128xf32, #tpu.memory_space<vmem>>, vector<16x128xf32>
    %c0_1 = arith.constant 0 : index
    %c0_2 = arith.constant 0 : index
    %1 = vector.load %arg6[%c0_1, %c0_2] : memref<64x72xbf16, #tpu.memory_space<vmem>>, vector<64x72xbf16>
    %c0_3 = arith.constant 0 : index
    %2 = memref.load %arg0[%c0_3] : memref<2xi32, #tpu.memory_space<smem>>
    %c1 = arith.constant 1 : index
    %3 = memref.load %arg0[%c1] : memref<2xi32, #tpu.memory_space<smem>>
    %4 = tpu.iota {dimensions = array<i32: 1>} : vector<1x4xi32>
    %c1_i32 = arith.constant 1 : i32
    %5 = vector.broadcast %c1_i32 : i32 to vector<1x4xi32>
    %6 = arith.addi %4, %5 : vector<1x4xi32>
    %c-1640531527_i32 = arith.constant -1640531527 : i32
    %7 = vector.broadcast %c-1640531527_i32 : i32 to vector<1x4xi32>
    %8 = arith.muli %6, %7 : vector<1x4xi32>
    %9 = vector.broadcast %2 : i32 to vector<1x4xi32>
    %10 = arith.addi %8, %9 : vector<1x4xi32>
    %c16_i32 = arith.constant 16 : i32
    %11 = vector.broadcast %c16_i32 : i32 to vector<1x4xi32>
    %12 = arith.shrsi %10, %11 : vector<1x4xi32>
    %13 = arith.xori %10, %12 : vector<1x4xi32>
    %c-2048144789_i32 = arith.constant -2048144789 : i32
    %14 = vector.broadcast %c-2048144789_i32 : i32 to vector<1x4xi32>
    %15 = arith.muli %13, %14 : vector<1x4xi32>
    %16 = vector.broadcast %3 : i32 to vector<1x4xi32>
    %17 = arith.xori %15, %16 : vector<1x4xi32>
    %c13_i32 = arith.constant 13 : i32
    %18 = vector.broadcast %c13_i32 : i32 to vector<1x4xi32>
    %19 = arith.shrsi %17, %18 : vector<1x4xi32>
    %20 = arith.xori %17, %19 : vector<1x4xi32>
    %c-1028477387_i32 = arith.constant -1028477387 : i32
    %21 = vector.broadcast %c-1028477387_i32 : i32 to vector<1x4xi32>
    %22 = arith.muli %20, %21 : vector<1x4xi32>
    %c16_i32_4 = arith.constant 16 : i32
    %23 = vector.broadcast %c16_i32_4 : i32 to vector<1x4xi32>
    %24 = arith.shrsi %22, %23 : vector<1x4xi32>
    %25 = arith.xori %22, %24 : vector<1x4xi32>
    %c8388607_i32 = arith.constant 8388607 : i32
    %26 = vector.broadcast %c8388607_i32 : i32 to vector<1x4xi32>
    %27 = arith.andi %25, %26 : vector<1x4xi32>
    %28 = arith.sitofp %27 : vector<1x4xi32> to vector<1x4xf32>
    %cst = arith.constant 5.000000e-01 : f32
    %29 = vector.broadcast %cst : f32 to vector<1x4xf32>
    %30 = arith.addf %28, %29 : vector<1x4xf32>
    %cst_5 = arith.constant 1.1920929E-7 : f32
    %31 = vector.broadcast %cst_5 : f32 to vector<1x4xf32>
    %32 = arith.mulf %30, %31 : vector<1x4xf32>
    %33 = math.log %32 : vector<1x4xf32>
    %cst_6 = arith.constant 0.000000e+00 : f32
    %34 = vector.broadcast %cst_6 : f32 to vector<1x4xf32>
    %35 = arith.subf %34, %33 : vector<1x4xf32>
    %36 = math.log %35 : vector<1x4xf32>
    %cst_7 = arith.constant 0.000000e+00 : f32
    %37 = vector.broadcast %cst_7 : f32 to vector<1x4xf32>
    %38 = arith.subf %37, %36 : vector<1x4xf32>
    %c0_8 = arith.constant 0 : index
    %c0_9 = arith.constant 0 : index
    %39 = vector.load %arg2[%c0_8, %c0_9] : memref<288x36xbf16, #tpu.memory_space<vmem>>, vector<288x36xbf16>
    %c0_10 = arith.constant 0 : index
    %c0_11 = arith.constant 0 : index
    %40 = vector.load %arg3[%c0_10, %c0_11] : memref<36x32xbf16, #tpu.memory_space<vmem>>, vector<36x32xbf16>
    %cst_12 = arith.constant dense<0.000000e+00> : vector<288x32xf32>
    %41 = tpu.matmul %39, %40, %cst_12 {dimension_numbers = #tpu.dot_dimension_numbers<[1], [0], [0], [1], [0, 0, 1, 1], [], []>} : vector<288x36xbf16>, vector<36x32xbf16>, vector<288x32xf32> -> vector<288x32xf32>
    %42 = vector.extract_strided_slice %0 {offsets = [0, 0], sizes = [1, 32], strides = [1, 1]} : vector<16x128xf32> to vector<1x32xf32>
    %43 = vector.broadcast %42 : vector<1x32xf32> to vector<288x32xf32>
    %44 = arith.addf %41, %43 : vector<288x32xf32>
    %cst_13 = arith.constant 0.000000e+00 : f32
    %45 = vector.broadcast %cst_13 : f32 to vector<288x32xf32>
    %46 = arith.maximumf %44, %45 : vector<288x32xf32>
    %47 = vector.extract_strided_slice %46 {offsets = [0, 0], sizes = [72, 32], strides = [1, 1]} : vector<288x32xf32> to vector<72x32xf32>
    %48 = vector.extract_strided_slice %46 {offsets = [72, 0], sizes = [72, 32], strides = [1, 1]} : vector<288x32xf32> to vector<72x32xf32>
    %49 = arith.maximumf %47, %48 : vector<72x32xf32>
    %50 = vector.extract_strided_slice %46 {offsets = [144, 0], sizes = [72, 32], strides = [1, 1]} : vector<288x32xf32> to vector<72x32xf32>
    %51 = vector.extract_strided_slice %46 {offsets = [216, 0], sizes = [72, 32], strides = [1, 1]} : vector<288x32xf32> to vector<72x32xf32>
    %52 = arith.maximumf %50, %51 : vector<72x32xf32>
    %53 = arith.maximumf %49, %52 : vector<72x32xf32>
    %54 = tpu.iota {dimensions = array<i32: 0>} : vector<72x1xi32>
    %c3_i32 = arith.constant 3 : i32
    %55 = vector.broadcast %c3_i32 : i32 to vector<72x1xi32>
    %56 = arith.shrsi %54, %55 : vector<72x1xi32>
    %c7_i32 = arith.constant 7 : i32
    %57 = vector.broadcast %c7_i32 : i32 to vector<72x1xi32>
    %58 = arith.andi %54, %57 : vector<72x1xi32>
    %c1_i32_14 = arith.constant 1 : i32
    %59 = vector.broadcast %c1_i32_14 : i32 to vector<72x1xi32>
    %60 = arith.cmpi sge, %56, %59 : vector<72x1xi32>
    %c6_i32 = arith.constant 6 : i32
    %61 = vector.broadcast %c6_i32 : i32 to vector<72x1xi32>
    %62 = arith.cmpi sle, %56, %61 : vector<72x1xi32>
    %63 = arith.andi %60, %62 : vector<72x1xi1>
    %c1_i32_15 = arith.constant 1 : i32
    %64 = vector.broadcast %c1_i32_15 : i32 to vector<72x1xi32>
    %65 = arith.cmpi sge, %58, %64 : vector<72x1xi32>
    %66 = arith.andi %63, %65 : vector<72x1xi1>
    %c6_i32_16 = arith.constant 6 : i32
    %67 = vector.broadcast %c6_i32_16 : i32 to vector<72x1xi32>
    %68 = arith.cmpi sle, %58, %67 : vector<72x1xi32>
    %69 = arith.andi %66, %68 : vector<72x1xi1>
    %70 = arith.extui %69 : vector<72x1xi1> to vector<72x1xi32>
    %71 = arith.sitofp %70 : vector<72x1xi32> to vector<72x1xf32>
    %72 = vector.broadcast %71 : vector<72x1xf32> to vector<72x32xf32>
    %73 = arith.mulf %53, %72 : vector<72x32xf32>
    %74 = vector.extract_strided_slice %73 {offsets = [0, 0], sizes = [48, 32], strides = [1, 1]} : vector<72x32xf32> to vector<48x32xf32>
    %75 = arith.truncf %74 : vector<48x32xf32> to vector<48x32xbf16>
    %c0_17 = arith.constant 0 : index
    %c0_18 = arith.constant 0 : index
    %76 = vector.load %arg4[%c0_17, %c0_18] : memref<288x64xbf16, #tpu.memory_space<vmem>>, vector<32x64xbf16>
    %cst_19 = arith.constant dense<0.000000e+00> : vector<48x64xf32>
    %77 = tpu.matmul %75, %76, %cst_19 {dimension_numbers = #tpu.dot_dimension_numbers<[1], [0], [0], [1], [0, 0, 1, 1], [], []>} : vector<48x32xbf16>, vector<32x64xbf16>, vector<48x64xf32> -> vector<48x64xf32>
    %78 = vector.extract_strided_slice %73 {offsets = [1, 0], sizes = [48, 32], strides = [1, 1]} : vector<72x32xf32> to vector<48x32xf32>
    %79 = arith.truncf %78 : vector<48x32xf32> to vector<48x32xbf16>
    %c32 = arith.constant 32 : index
    %c0_20 = arith.constant 0 : index
    %80 = vector.load %arg4[%c32, %c0_20] : memref<288x64xbf16, #tpu.memory_space<vmem>>, vector<32x64xbf16>
    %cst_21 = arith.constant dense<0.000000e+00> : vector<48x64xf32>
    %81 = tpu.matmul %79, %80, %cst_21 {dimension_numbers = #tpu.dot_dimension_numbers<[1], [0], [0], [1], [0, 0, 1, 1], [], []>} : vector<48x32xbf16>, vector<32x64xbf16>, vector<48x64xf32> -> vector<48x64xf32>
    %82 = arith.addf %77, %81 : vector<48x64xf32>
    %83 = vector.extract_strided_slice %73 {offsets = [2, 0], sizes = [48, 32], strides = [1, 1]} : vector<72x32xf32> to vector<48x32xf32>
    %84 = arith.truncf %83 : vector<48x32xf32> to vector<48x32xbf16>
    %c64 = arith.constant 64 : index
    %c0_22 = arith.constant 0 : index
    %85 = vector.load %arg4[%c64, %c0_22] : memref<288x64xbf16, #tpu.memory_space<vmem>>, vector<32x64xbf16>
    %cst_23 = arith.constant dense<0.000000e+00> : vector<48x64xf32>
    %86 = tpu.matmul %84, %85, %cst_23 {dimension_numbers = #tpu.dot_dimension_numbers<[1], [0], [0], [1], [0, 0, 1, 1], [], []>} : vector<48x32xbf16>, vector<32x64xbf16>, vector<48x64xf32> -> vector<48x64xf32>
    %87 = arith.addf %82, %86 : vector<48x64xf32>
    %88 = vector.extract_strided_slice %73 {offsets = [8, 0], sizes = [48, 32], strides = [1, 1]} : vector<72x32xf32> to vector<48x32xf32>
    %89 = arith.truncf %88 : vector<48x32xf32> to vector<48x32xbf16>
    %c96 = arith.constant 96 : index
    %c0_24 = arith.constant 0 : index
    %90 = vector.load %arg4[%c96, %c0_24] : memref<288x64xbf16, #tpu.memory_space<vmem>>, vector<32x64xbf16>
    %cst_25 = arith.constant dense<0.000000e+00> : vector<48x64xf32>
    %91 = tpu.matmul %89, %90, %cst_25 {dimension_numbers = #tpu.dot_dimension_numbers<[1], [0], [0], [1], [0, 0, 1, 1], [], []>} : vector<48x32xbf16>, vector<32x64xbf16>, vector<48x64xf32> -> vector<48x64xf32>
    %92 = arith.addf %87, %91 : vector<48x64xf32>
    %93 = vector.extract_strided_slice %73 {offsets = [9, 0], sizes = [48, 32], strides = [1, 1]} : vector<72x32xf32> to vector<48x32xf32>
    %94 = arith.truncf %93 : vector<48x32xf32> to vector<48x32xbf16>
    %c128 = arith.constant 128 : index
    %c0_26 = arith.constant 0 : index
    %95 = vector.load %arg4[%c128, %c0_26] : memref<288x64xbf16, #tpu.memory_space<vmem>>, vector<32x64xbf16>
    %cst_27 = arith.constant dense<0.000000e+00> : vector<48x64xf32>
    %96 = tpu.matmul %94, %95, %cst_27 {dimension_numbers = #tpu.dot_dimension_numbers<[1], [0], [0], [1], [0, 0, 1, 1], [], []>} : vector<48x32xbf16>, vector<32x64xbf16>, vector<48x64xf32> -> vector<48x64xf32>
    %97 = arith.addf %92, %96 : vector<48x64xf32>
    %98 = vector.extract_strided_slice %73 {offsets = [10, 0], sizes = [48, 32], strides = [1, 1]} : vector<72x32xf32> to vector<48x32xf32>
    %99 = arith.truncf %98 : vector<48x32xf32> to vector<48x32xbf16>
    %c160 = arith.constant 160 : index
    %c0_28 = arith.constant 0 : index
    %100 = vector.load %arg4[%c160, %c0_28] : memref<288x64xbf16, #tpu.memory_space<vmem>>, vector<32x64xbf16>
    %cst_29 = arith.constant dense<0.000000e+00> : vector<48x64xf32>
    %101 = tpu.matmul %99, %100, %cst_29 {dimension_numbers = #tpu.dot_dimension_numbers<[1], [0], [0], [1], [0, 0, 1, 1], [], []>} : vector<48x32xbf16>, vector<32x64xbf16>, vector<48x64xf32> -> vector<48x64xf32>
    %102 = arith.addf %97, %101 : vector<48x64xf32>
    %103 = vector.extract_strided_slice %73 {offsets = [16, 0], sizes = [48, 32], strides = [1, 1]} : vector<72x32xf32> to vector<48x32xf32>
    %104 = arith.truncf %103 : vector<48x32xf32> to vector<48x32xbf16>
    %c192 = arith.constant 192 : index
    %c0_30 = arith.constant 0 : index
    %105 = vector.load %arg4[%c192, %c0_30] : memref<288x64xbf16, #tpu.memory_space<vmem>>, vector<32x64xbf16>
    %cst_31 = arith.constant dense<0.000000e+00> : vector<48x64xf32>
    %106 = tpu.matmul %104, %105, %cst_31 {dimension_numbers = #tpu.dot_dimension_numbers<[1], [0], [0], [1], [0, 0, 1, 1], [], []>} : vector<48x32xbf16>, vector<32x64xbf16>, vector<48x64xf32> -> vector<48x64xf32>
    %107 = arith.addf %102, %106 : vector<48x64xf32>
    %108 = vector.extract_strided_slice %73 {offsets = [17, 0], sizes = [48, 32], strides = [1, 1]} : vector<72x32xf32> to vector<48x32xf32>
    %109 = arith.truncf %108 : vector<48x32xf32> to vector<48x32xbf16>
    %c224 = arith.constant 224 : index
    %c0_32 = arith.constant 0 : index
    %110 = vector.load %arg4[%c224, %c0_32] : memref<288x64xbf16, #tpu.memory_space<vmem>>, vector<32x64xbf16>
    %cst_33 = arith.constant dense<0.000000e+00> : vector<48x64xf32>
    %111 = tpu.matmul %109, %110, %cst_33 {dimension_numbers = #tpu.dot_dimension_numbers<[1], [0], [0], [1], [0, 0, 1, 1], [], []>} : vector<48x32xbf16>, vector<32x64xbf16>, vector<48x64xf32> -> vector<48x64xf32>
    %112 = arith.addf %107, %111 : vector<48x64xf32>
    %113 = vector.extract_strided_slice %73 {offsets = [18, 0], sizes = [48, 32], strides = [1, 1]} : vector<72x32xf32> to vector<48x32xf32>
    %114 = arith.truncf %113 : vector<48x32xf32> to vector<48x32xbf16>
    %c256 = arith.constant 256 : index
    %c0_34 = arith.constant 0 : index
    %115 = vector.load %arg4[%c256, %c0_34] : memref<288x64xbf16, #tpu.memory_space<vmem>>, vector<32x64xbf16>
    %cst_35 = arith.constant dense<0.000000e+00> : vector<48x64xf32>
    %116 = tpu.matmul %114, %115, %cst_35 {dimension_numbers = #tpu.dot_dimension_numbers<[1], [0], [0], [1], [0, 0, 1, 1], [], []>} : vector<48x32xbf16>, vector<32x64xbf16>, vector<48x64xf32> -> vector<48x64xf32>
    %117 = arith.addf %112, %116 : vector<48x64xf32>
    %118 = vector.extract_strided_slice %0 {offsets = [1, 0], sizes = [1, 64], strides = [1, 1]} : vector<16x128xf32> to vector<1x64xf32>
    %119 = vector.broadcast %118 : vector<1x64xf32> to vector<48x64xf32>
    %120 = arith.addf %117, %119 : vector<48x64xf32>
    %cst_36 = arith.constant 0.000000e+00 : f32
    %121 = vector.broadcast %cst_36 : f32 to vector<48x64xf32>
    %122 = arith.maximumf %120, %121 : vector<48x64xf32>
    %123 = vector.extract_strided_slice %122 {offsets = [0, 0], sizes = [40, 64], strides = [1, 1]} : vector<48x64xf32> to vector<40x64xf32>
    %124 = vector.extract_strided_slice %122 {offsets = [8, 0], sizes = [40, 64], strides = [1, 1]} : vector<48x64xf32> to vector<40x64xf32>
    %125 = arith.maximumf %123, %124 : vector<40x64xf32>
    %126 = vector.extract_strided_slice %125 {offsets = [0, 0], sizes = [39, 64], strides = [1, 1]} : vector<40x64xf32> to vector<39x64xf32>
    %127 = vector.extract_strided_slice %125 {offsets = [1, 0], sizes = [39, 64], strides = [1, 1]} : vector<40x64xf32> to vector<39x64xf32>
    %128 = arith.maximumf %126, %127 : vector<39x64xf32>
    %129 = vector.extract_strided_slice %128 {offsets = [0, 0], sizes = [1, 64], strides = [1, 1]} : vector<39x64xf32> to vector<1x64xf32>
    %130 = arith.truncf %129 : vector<1x64xf32> to vector<1x64xbf16>
    %c0_37 = arith.constant 0 : index
    %c0_38 = arith.constant 0 : index
    %131 = vector.load %arg5[%c0_37, %c0_38] : memref<576x128xbf16, #tpu.memory_space<vmem>>, vector<64x128xbf16>
    %cst_39 = arith.constant dense<0.000000e+00> : vector<1x128xf32>
    %132 = tpu.matmul %130, %131, %cst_39 {dimension_numbers = #tpu.dot_dimension_numbers<[1], [0], [0], [1], [0, 0, 1, 1], [], []>} : vector<1x64xbf16>, vector<64x128xbf16>, vector<1x128xf32> -> vector<1x128xf32>
    %133 = vector.extract_strided_slice %128 {offsets = [2, 0], sizes = [1, 64], strides = [1, 1]} : vector<39x64xf32> to vector<1x64xf32>
    %134 = arith.truncf %133 : vector<1x64xf32> to vector<1x64xbf16>
    %c64_40 = arith.constant 64 : index
    %c0_41 = arith.constant 0 : index
    %135 = vector.load %arg5[%c64_40, %c0_41] : memref<576x128xbf16, #tpu.memory_space<vmem>>, vector<64x128xbf16>
    %cst_42 = arith.constant dense<0.000000e+00> : vector<1x128xf32>
    %136 = tpu.matmul %134, %135, %cst_42 {dimension_numbers = #tpu.dot_dimension_numbers<[1], [0], [0], [1], [0, 0, 1, 1], [], []>} : vector<1x64xbf16>, vector<64x128xbf16>, vector<1x128xf32> -> vector<1x128xf32>
    %137 = arith.addf %132, %136 : vector<1x128xf32>
    %138 = vector.extract_strided_slice %128 {offsets = [4, 0], sizes = [1, 64], strides = [1, 1]} : vector<39x64xf32> to vector<1x64xf32>
    %139 = arith.truncf %138 : vector<1x64xf32> to vector<1x64xbf16>
    %c128_43 = arith.constant 128 : index
    %c0_44 = arith.constant 0 : index
    %140 = vector.load %arg5[%c128_43, %c0_44] : memref<576x128xbf16, #tpu.memory_space<vmem>>, vector<64x128xbf16>
    %cst_45 = arith.constant dense<0.000000e+00> : vector<1x128xf32>
    %141 = tpu.matmul %139, %140, %cst_45 {dimension_numbers = #tpu.dot_dimension_numbers<[1], [0], [0], [1], [0, 0, 1, 1], [], []>} : vector<1x64xbf16>, vector<64x128xbf16>, vector<1x128xf32> -> vector<1x128xf32>
    %142 = arith.addf %137, %141 : vector<1x128xf32>
    %143 = vector.extract_strided_slice %128 {offsets = [16, 0], sizes = [1, 64], strides = [1, 1]} : vector<39x64xf32> to vector<1x64xf32>
    %144 = arith.truncf %143 : vector<1x64xf32> to vector<1x64xbf16>
    %c192_46 = arith.constant 192 : index
    %c0_47 = arith.constant 0 : index
    %145 = vector.load %arg5[%c192_46, %c0_47] : memref<576x128xbf16, #tpu.memory_space<vmem>>, vector<64x128xbf16>
    %cst_48 = arith.constant dense<0.000000e+00> : vector<1x128xf32>
    %146 = tpu.matmul %144, %145, %cst_48 {dimension_numbers = #tpu.dot_dimension_numbers<[1], [0], [0], [1], [0, 0, 1, 1], [], []>} : vector<1x64xbf16>, vector<64x128xbf16>, vector<1x128xf32> -> vector<1x128xf32>
    %147 = arith.addf %142, %146 : vector<1x128xf32>
    %148 = vector.extract_strided_slice %128 {offsets = [18, 0], sizes = [1, 64], strides = [1, 1]} : vector<39x64xf32> to vector<1x64xf32>
    %149 = arith.truncf %148 : vector<1x64xf32> to vector<1x64xbf16>
    %c256_49 = arith.constant 256 : index
    %c0_50 = arith.constant 0 : index
    %150 = vector.load %arg5[%c256_49, %c0_50] : memref<576x128xbf16, #tpu.memory_space<vmem>>, vector<64x128xbf16>
    %cst_51 = arith.constant dense<0.000000e+00> : vector<1x128xf32>
    %151 = tpu.matmul %149, %150, %cst_51 {dimension_numbers = #tpu.dot_dimension_numbers<[1], [0], [0], [1], [0, 0, 1, 1], [], []>} : vector<1x64xbf16>, vector<64x128xbf16>, vector<1x128xf32> -> vector<1x128xf32>
    %152 = arith.addf %147, %151 : vector<1x128xf32>
    %153 = vector.extract_strided_slice %128 {offsets = [20, 0], sizes = [1, 64], strides = [1, 1]} : vector<39x64xf32> to vector<1x64xf32>
    %154 = arith.truncf %153 : vector<1x64xf32> to vector<1x64xbf16>
    %c320 = arith.constant 320 : index
    %c0_52 = arith.constant 0 : index
    %155 = vector.load %arg5[%c320, %c0_52] : memref<576x128xbf16, #tpu.memory_space<vmem>>, vector<64x128xbf16>
    %cst_53 = arith.constant dense<0.000000e+00> : vector<1x128xf32>
    %156 = tpu.matmul %154, %155, %cst_53 {dimension_numbers = #tpu.dot_dimension_numbers<[1], [0], [0], [1], [0, 0, 1, 1], [], []>} : vector<1x64xbf16>, vector<64x128xbf16>, vector<1x128xf32> -> vector<1x128xf32>
    %157 = arith.addf %152, %156 : vector<1x128xf32>
    %158 = vector.extract_strided_slice %128 {offsets = [32, 0], sizes = [1, 64], strides = [1, 1]} : vector<39x64xf32> to vector<1x64xf32>
    %159 = arith.truncf %158 : vector<1x64xf32> to vector<1x64xbf16>
    %c384 = arith.constant 384 : index
    %c0_54 = arith.constant 0 : index
    %160 = vector.load %arg5[%c384, %c0_54] : memref<576x128xbf16, #tpu.memory_space<vmem>>, vector<64x128xbf16>
    %cst_55 = arith.constant dense<0.000000e+00> : vector<1x128xf32>
    %161 = tpu.matmul %159, %160, %cst_55 {dimension_numbers = #tpu.dot_dimension_numbers<[1], [0], [0], [1], [0, 0, 1, 1], [], []>} : vector<1x64xbf16>, vector<64x128xbf16>, vector<1x128xf32> -> vector<1x128xf32>
    %162 = arith.addf %157, %161 : vector<1x128xf32>
    %163 = vector.extract_strided_slice %128 {offsets = [34, 0], sizes = [1, 64], strides = [1, 1]} : vector<39x64xf32> to vector<1x64xf32>
    %164 = arith.truncf %163 : vector<1x64xf32> to vector<1x64xbf16>
    %c448 = arith.constant 448 : index
    %c0_56 = arith.constant 0 : index
    %165 = vector.load %arg5[%c448, %c0_56] : memref<576x128xbf16, #tpu.memory_space<vmem>>, vector<64x128xbf16>
    %cst_57 = arith.constant dense<0.000000e+00> : vector<1x128xf32>
    %166 = tpu.matmul %164, %165, %cst_57 {dimension_numbers = #tpu.dot_dimension_numbers<[1], [0], [0], [1], [0, 0, 1, 1], [], []>} : vector<1x64xbf16>, vector<64x128xbf16>, vector<1x128xf32> -> vector<1x128xf32>
    %167 = arith.addf %162, %166 : vector<1x128xf32>
    %168 = vector.extract_strided_slice %128 {offsets = [36, 0], sizes = [1, 64], strides = [1, 1]} : vector<39x64xf32> to vector<1x64xf32>
    %169 = arith.truncf %168 : vector<1x64xf32> to vector<1x64xbf16>
    %c512 = arith.constant 512 : index
    %c0_58 = arith.constant 0 : index
    %170 = vector.load %arg5[%c512, %c0_58] : memref<576x128xbf16, #tpu.memory_space<vmem>>, vector<64x128xbf16>
    %cst_59 = arith.constant dense<0.000000e+00> : vector<1x128xf32>
    %171 = tpu.matmul %169, %170, %cst_59 {dimension_numbers = #tpu.dot_dimension_numbers<[1], [0], [0], [1], [0, 0, 1, 1], [], []>} : vector<1x64xbf16>, vector<64x128xbf16>, vector<1x128xf32> -> vector<1x128xf32>
    %172 = arith.addf %167, %171 : vector<1x128xf32>
    %c0_60 = arith.constant 0 : index
    %173 = memref.load %arg1[%c0_60] : memref<1xf32, #tpu.memory_space<smem>>
    %174 = vector.extract_strided_slice %172 {offsets = [0, 0], sizes = [1, 64], strides = [1, 1]} : vector<1x128xf32> to vector<1x64xf32>
    %175 = vector.extract_strided_slice %0 {offsets = [2, 0], sizes = [1, 64], strides = [1, 1]} : vector<16x128xf32> to vector<1x64xf32>
    %176 = arith.addf %174, %175 : vector<1x64xf32>
    %177 = vector.extract_strided_slice %0 {offsets = [3, 0], sizes = [1, 64], strides = [1, 1]} : vector<16x128xf32> to vector<1x64xf32>
    %178 = vector.broadcast %173 : f32 to vector<1x64xf32>
    %179 = arith.mulf %178, %177 : vector<1x64xf32>
    %180 = arith.addf %176, %179 : vector<1x64xf32>
    %cst_61 = arith.constant 0.000000e+00 : f32
    %181 = vector.broadcast %cst_61 : f32 to vector<1x64xf32>
    %182 = arith.maximumf %180, %181 : vector<1x64xf32>
    %183 = vector.extract_strided_slice %172 {offsets = [0, 64], sizes = [1, 64], strides = [1, 1]} : vector<1x128xf32> to vector<1x64xf32>
    %184 = vector.extract_strided_slice %0 {offsets = [4, 0], sizes = [1, 64], strides = [1, 1]} : vector<16x128xf32> to vector<1x64xf32>
    %185 = arith.addf %183, %184 : vector<1x64xf32>
    %186 = vector.extract_strided_slice %0 {offsets = [6, 0], sizes = [1, 64], strides = [1, 1]} : vector<16x128xf32> to vector<1x64xf32>
    %187 = vector.broadcast %173 : f32 to vector<1x64xf32>
    %188 = arith.mulf %187, %186 : vector<1x64xf32>
    %189 = arith.addf %185, %188 : vector<1x64xf32>
    %190 = tpu.iota {dimensions = array<i32: 0>} : vector<4x1xi32>
    %191 = arith.sitofp %190 : vector<4x1xi32> to vector<4x1xf32>
    %192 = vector.extract_strided_slice %0 {offsets = [5, 0], sizes = [1, 64], strides = [1, 1]} : vector<16x128xf32> to vector<1x64xf32>
    %193 = vector.broadcast %191 : vector<4x1xf32> to vector<4x64xf32>
    %194 = vector.broadcast %192 : vector<1x64xf32> to vector<4x64xf32>
    %195 = arith.mulf %193, %194 : vector<4x64xf32>
    %196 = vector.broadcast %189 : vector<1x64xf32> to vector<4x64xf32>
    %197 = arith.addf %196, %195 : vector<4x64xf32>
    %cst_62 = arith.constant 0.000000e+00 : f32
    %198 = vector.broadcast %cst_62 : f32 to vector<4x64xf32>
    %199 = arith.maximumf %197, %198 : vector<4x64xf32>
    %200 = tpu.concatenate %182, %199 in 0 : vector<1x64xf32>, vector<4x64xf32> -> vector<5x64xf32>
    %201 = arith.truncf %200 : vector<5x64xf32> to vector<5x64xbf16>
    %202 = vector.extract_strided_slice %1 {offsets = [0, 0], sizes = [64, 64], strides = [1, 1]} : vector<64x72xbf16> to vector<64x64xbf16>
    %cst_63 = arith.constant dense<0.000000e+00> : vector<5x64xf32>
    %203 = tpu.matmul %201, %202, %cst_63 {dimension_numbers = #tpu.dot_dimension_numbers<[1], [0], [0], [1], [0, 0, 1, 1], [], []>} : vector<5x64xbf16>, vector<64x64xbf16>, vector<5x64xf32> -> vector<5x64xf32>
    %204 = vector.extract_strided_slice %0 {offsets = [7, 0], sizes = [1, 64], strides = [1, 1]} : vector<16x128xf32> to vector<1x64xf32>
    %205 = vector.broadcast %204 : vector<1x64xf32> to vector<5x64xf32>
    %206 = arith.addf %203, %205 : vector<5x64xf32>
    %cst_64 = arith.constant 0.000000e+00 : f32
    %207 = vector.broadcast %cst_64 : f32 to vector<5x64xf32>
    %208 = arith.maximumf %206, %207 : vector<5x64xf32>
    %209 = arith.truncf %208 : vector<5x64xf32> to vector<5x64xbf16>
    %210 = vector.extract_strided_slice %1 {offsets = [0, 64], sizes = [64, 8], strides = [1, 1]} : vector<64x72xbf16> to vector<64x8xbf16>
    %cst_65 = arith.constant dense<0.000000e+00> : vector<5x8xf32>
    %211 = tpu.matmul %209, %210, %cst_65 {dimension_numbers = #tpu.dot_dimension_numbers<[1], [0], [0], [1], [0, 0, 1, 1], [], []>} : vector<5x64xbf16>, vector<64x8xbf16>, vector<5x8xf32> -> vector<5x8xf32>
    %212 = vector.extract_strided_slice %0 {offsets = [8, 0], sizes = [1, 8], strides = [1, 1]} : vector<16x128xf32> to vector<1x8xf32>
    %213 = vector.broadcast %212 : vector<1x8xf32> to vector<5x8xf32>
    %214 = arith.addf %211, %213 : vector<5x8xf32>
    %215 = vector.extract_strided_slice %214 {offsets = [0, 0], sizes = [1, 4], strides = [1, 1]} : vector<5x8xf32> to vector<1x4xf32>
    %216 = vector.extract_strided_slice %214 {offsets = [1, 4], sizes = [4, 1], strides = [1, 1]} : vector<5x8xf32> to vector<4x1xf32>
    %cst_66 = arith.constant dense<0xFF800000> : vector<1xf32>
    %217 = vector.multi_reduction <maximumf>, %215, %cst_66 [1] : vector<1x4xf32> to vector<1xf32>
    %218 = vector.shape_cast %217 : vector<1xf32> to vector<1x1xf32>
    %219 = vector.broadcast %218 : vector<1x1xf32> to vector<1x4xf32>
    %220 = arith.subf %215, %219 : vector<1x4xf32>
    %221 = math.exp %220 : vector<1x4xf32>
    %cst_67 = arith.constant dense<0.000000e+00> : vector<1xf32>
    %222 = vector.multi_reduction <add>, %221, %cst_67 [1] : vector<1x4xf32> to vector<1xf32>
    %223 = vector.shape_cast %222 : vector<1xf32> to vector<1x1xf32>
    %224 = math.log %223 : vector<1x1xf32>
    %225 = vector.broadcast %224 : vector<1x1xf32> to vector<1x4xf32>
    %226 = arith.subf %220, %225 : vector<1x4xf32>
    %227 = arith.mulf %221, %220 : vector<1x4xf32>
    %cst_68 = arith.constant dense<0.000000e+00> : vector<1xf32>
    %228 = vector.multi_reduction <add>, %227, %cst_68 [1] : vector<1x4xf32> to vector<1xf32>
    %229 = vector.shape_cast %228 : vector<1xf32> to vector<1x1xf32>
    %230 = arith.divf %229, %223 : vector<1x1xf32>
    %231 = arith.subf %224, %230 : vector<1x1xf32>
    %232 = arith.addf %226, %38 : vector<1x4xf32>
    %cst_69 = arith.constant dense<0xFF800000> : vector<1xf32>
    %233 = vector.multi_reduction <maximumf>, %232, %cst_69 [1] : vector<1x4xf32> to vector<1xf32>
    %234 = vector.shape_cast %233 : vector<1xf32> to vector<1x1xf32>
    %235 = arith.sitofp %4 : vector<1x4xi32> to vector<1x4xf32>
    %236 = vector.broadcast %234 : vector<1x1xf32> to vector<1x4xf32>
    %237 = arith.cmpf oge, %232, %236 : vector<1x4xf32>
    %cst_70 = arith.constant 1.000000e+09 : f32
    %238 = vector.broadcast %cst_70 : f32 to vector<1x4xf32>
    %239 = arith.select %237, %235, %238 : vector<1x4xi1>, vector<1x4xf32>
    %cst_71 = arith.constant dense<0x7F800000> : vector<1xf32>
    %240 = vector.multi_reduction <minimumf>, %239, %cst_71 [1] : vector<1x4xf32> to vector<1xf32>
    %241 = vector.shape_cast %240 : vector<1xf32> to vector<1x1xf32>
    %242 = vector.broadcast %241 : vector<1x1xf32> to vector<1x4xf32>
    %243 = arith.cmpf oeq, %235, %242 : vector<1x4xf32>
    %cst_72 = arith.constant 0.000000e+00 : f32
    %244 = vector.broadcast %cst_72 : f32 to vector<1x4xf32>
    %245 = arith.select %243, %226, %244 : vector<1x4xi1>, vector<1x4xf32>
    %cst_73 = arith.constant dense<0.000000e+00> : vector<1xf32>
    %246 = vector.multi_reduction <add>, %245, %cst_73 [1] : vector<1x4xf32> to vector<1xf32>
    %247 = vector.shape_cast %246 : vector<1xf32> to vector<1x1xf32>
    %248 = vector.broadcast %241 : vector<1x1xf32> to vector<4x1xf32>
    %249 = arith.cmpf oeq, %191, %248 : vector<4x1xf32>
    %cst_74 = arith.constant 0.000000e+00 : f32
    %250 = vector.broadcast %cst_74 : f32 to vector<4x1xf32>
    %251 = arith.select %249, %216, %250 : vector<4x1xi1>, vector<4x1xf32>
    %cst_75 = arith.constant dense<0.000000e+00> : vector<1xf32>
    %252 = vector.multi_reduction <add>, %251, %cst_75 [0] : vector<4x1xf32> to vector<1xf32>
    %253 = vector.shape_cast %252 : vector<1xf32> to vector<1x1xf32>
    %cst_76 = arith.constant 0.000000e+00 : f32
    %254 = vector.broadcast %cst_76 : f32 to vector<1x4xf32>
    %255 = tpu.concatenate %241, %247, %253, %231, %254 in 1 : vector<1x1xf32>, vector<1x1xf32>, vector<1x1xf32>, vector<1x1xf32>, vector<1x4xf32> -> vector<1x8xf32>
    %c0_77 = arith.constant 0 : index
    %c0_78 = arith.constant 0 : index
    %256 = vector.load %arg8[%c0_77, %c0_78] : memref<1x8xf32, #tpu.memory_space<vmem>>, vector<1x8xf32>
    tpu.vector_store %arg8[%c0_77, %c0_78], %255 {strides = array<i32>} : memref<1x8xf32, #tpu.memory_space<vmem>>, vector<1x8xf32>,
    return
  }
}

</mosaic_0001>

<llo_original>
// kernel: forward.1
$region0: #{forward.1}
  #allocation0 [shape = 'u32[]', space=smem, size = 0x4, offset = 0x4, fixed_abs, tag = 'smem constant byte address 0x4 - core index']
  #allocation1 [shape = 'u32[144,128]{1,0:T(1,128)}', space=vmem, size = 0x12000, scoped, tag = 'internal scratch']
  #allocation2 [shape = 'f32[1]{0:T(128)S(6)}', space=smem, size = 0x200, scoped, tag = 'scoped memory for forward.1']
  %s0 = inlined_call_operand.vmem [shape: s32[2], index: 0, kind: input, shape index: {}]
  %s1 = inlined_call_operand.<no memory space> [shape: f32[1], index: 1, kind: input, shape index: {}]
  %s2 = inlined_call_operand.vmem [shape: bf16[288,36], index: 2, kind: input, shape index: {}]
  %s3 = inlined_call_operand.vmem [shape: bf16[36,32], index: 3, kind: input, shape index: {}]
  %s4 = inlined_call_operand.vmem [shape: bf16[288,64], index: 4, kind: input, shape index: {}]
  %s5 = inlined_call_operand.vmem [shape: bf16[576,128], index: 5, kind: input, shape index: {}]
  %s6 = inlined_call_operand.vmem [shape: bf16[64,72], index: 6, kind: input, shape index: {}]
  %s7 = inlined_call_operand.vmem [shape: f32[16,128], index: 7, kind: input, shape index: {}]
  %s8 = inlined_call_operand.vmem [shape: f32[1,8], index: 8, kind: output, shape index: {}]
  %s9 = sld [smem:[#allocation0]]
  $region46: #{forward.1} parent=0
    _
  %s11 = ssub.s32 1, %s9
  %s12 = scalar_select 0, %s11, %s9
  %13 = sst [smem:[#allocation2]] %s1
  $region1: #{forward.1} parent=0
    #allocation3 [shape = 'u8[512]{0}', space=smem, size = 0x200, scoped, tag = 'input window, operand 0, single buffered']
    #allocation4 [shape = 's32[1]{0}', space=sflag, size = 0x4, scoped, tag = 'scoped memory for forward.1']
    %14 = vsyncpa [#allocation4], 0
    // Predicated region
    $region2: #{forward.1} parent=1 // pred_check
      _
    $region3: #{forward.1} parent=1 // pred_check_branch
      %16 = sbr.rel (0) target = $region5
    $region4: #{forward.1} parent=1 // pred_region
      %s18 = ssub.s32 16, 16
      %19 = vsyncadd [#allocation4], %s18
      %s21 = sshll.u32 %s0, 4
      %s22 = int_to_ptr.vmem [resolvable:$true] %s21
      %24 = dma.vmem_to_smem %s22, 16, [#allocation3], [#allocation4]
    $region5: #{forward.1} parent=1 // pred_fallthru
      _
    // Predicated region
    $region6: #{forward.1} parent=1 // pred_check
      _
    $region7: #{forward.1} parent=1 // pred_check_branch
      %26 = sbr.rel (0) target = $region9
    $region8: #{forward.1} parent=1 // pred_region
      _
    $region9: #{forward.1} parent=1 // pred_fallthru
      _
    // Predicated region
    $region10: #{forward.1} parent=1 // pred_check
      _
    $region11: #{forward.1} parent=1 // pred_check_branch
      %28 = sbr.rel (0) target = $region13
    $region12: #{forward.1} parent=1 // pred_region
      _
    $region13: #{forward.1} parent=1 // pred_fallthru
      _
    // Predicated region
    $region14: #{forward.1} parent=1 // pred_check
      _
    $region15: #{forward.1} parent=1 // pred_check_branch
      %30 = sbr.rel (0) target = $region17
    $region16: #{forward.1} parent=1 // pred_region
      _
    $region17: #{forward.1} parent=1 // pred_fallthru
      _
    // Predicated region
    $region18: #{forward.1} parent=1 // pred_check
      _
    $region19: #{forward.1} parent=1 // pred_check_branch
      %32 = sbr.rel (0) target = $region21
    $region20: #{forward.1} parent=1 // pred_region
      _
    $region21: #{forward.1} parent=1 // pred_fallthru
      _
    // Predicated region
    $region22: #{forward.1} parent=1 // pred_check
      _
    $region23: #{forward.1} parent=1 // pred_check_branch
      %34 = sbr.rel (0) target = $region25
    $region24: #{forward.1} parent=1 // pred_region
      _
    $region25: #{forward.1} parent=1 // pred_fallthru
      _
    // Predicated region
    $region26: #{forward.1} parent=1 // pred_check
      _
    $region27: #{forward.1} parent=1 // pred_check_branch
      %36 = sbr.rel (0) target = $region29
    $region28: #{forward.1} parent=1 // pred_region
      _
    $region29: #{forward.1} parent=1 // pred_fallthru
      _
    // Predicated region
    $region30: #{forward.1} parent=1 // pred_check
      _
    $region31: #{forward.1} parent=1 // pred_check_branch
      %38 = sbr.rel (0) target = $region33
    $region32: #{forward.1} parent=1 // pred_region
      _
    $region33: #{forward.1} parent=1 // pred_fallthru
      _
    // Predicated region
    $region34: #{forward.1} parent=1 // pred_check
      _
    $region35: #{forward.1} parent=1 // pred_check_branch
      %40 = sbr.rel (0) target = $region37
    $region36: #{forward.1} parent=1 // pred_region
      %41 = dma.done [#allocation4], 16
    $region37: #{forward.1} parent=1 // pred_fallthru
      _
    %42 = sfence
    %v44 = vld [vmem:[%s7] sm:$0xff]
    %v45 = vld [vmem:[%s7 + $0x8] sm:$0xff]
    %v46 = vld [vmem:[%s6] sm:$0xf]
    %v47 = vld [vmem:[%s6 + $0x4] sm:$0xf]
    %v48 = vld [vmem:[%s6 + $0x8] sm:$0xf]
    %v49 = vld [vmem:[%s6 + $0xc] sm:$0xf]
    %v50 = vld [vmem:[%s6 + $0x10] sm:$0xf]
    %v51 = vld [vmem:[%s6 + $0x14] sm:$0xf]
    %v52 = vld [vmem:[%s6 + $0x18] sm:$0xf]
    %v53 = vld [vmem:[%s6 + $0x1c] sm:$0xf]
    %s54 = sld [smem:[#allocation3]]
    %s55 = sld [smem:[#allocation3 + $0x1]]
    %v56 = vlaneseq
    %v57 = vand.u32 %v56, 127
    %v58 = vadd.s32 %v57, 1
    %v59 = vmul.u32 %v58, 2654435769
    %v60 = vstv %s54
    %v61 = vadd.s32 %v59, %v60
    %v62 = vshra.s32 %v61, 16
    %v63 = vxor.u32 %v61, %v62
    %v64 = vmul.u32 %v63, 2246822507
    %v65 = vstv %s55
    %v66 = vxor.u32 %v64, %v65
    %v67 = vshra.s32 %v66, 13
    %v68 = vxor.u32 %v66, %v67
    %v69 = vmul.u32 %v68, 3266489909
    %v70 = vshra.s32 %v69, 16
    %v71 = vxor.u32 %v69, %v70
    %v72 = vand.u32 %v71, 8388607
    %v73 = vcvt.s32.f32 %v72
    %v74 = vadd.f32 %v73, 0.5
    %v75 = vmul.f32 %v74, 1.1920929e-07
    %v76 = vlog2.pop %v75
    %v77 = vmul.f32 %v76, 0.6931472
    %v78 = vsub.f32 0.0, %v77
    %v79 = vlog2.pop %v78
    %v80 = vmul.f32 %v79, 0.6931472
    %v81 = vsub.f32 0.0, %v80
    %v82 = vld [vmem:[%s2] sm:$0xf]
    %v83 = vld [vmem:[%s2 + $0x4] sm:$0xf]
    %v84 = vld [vmem:[%s2 + $0x8] sm:$0xf]
    %v85 = vld [vmem:[%s2 + $0xc] sm:$0xf]
    %v86 = vld [vmem:[%s2 + $0x10] sm:$0xf]
    %v87 = vld [vmem:[%s2 + $0x14] sm:$0xf]
    %v88 = vld [vmem:[%s2 + $0x18] sm:$0xf]
    %v89 = vld [vmem:[%s2 + $0x1c] sm:$0xf]
    %v90 = vld [vmem:[%s2 + $0x20] sm:$0xf]
    %v91 = vld [vmem:[%s2 + $0x24] sm:$0xf]
    %v92 = vld [vmem:[%s2 + $0x28] sm:$0xf]
    %v93 = vld [vmem:[%s2 + $0x2c] sm:$0xf]
    %v94 = vld [vmem:[%s2 + $0x30] sm:$0xf]
    %v95 = vld [vmem:[%s2 + $0x34] sm:$0xf]
    %v96 = vld [vmem:[%s2 + $0x38] sm:$0xf]
    %v97 = vld [vmem:[%s2 + $0x3c] sm:$0xf]
    %v98 = vld [vmem:[%s2 + $0x40] sm:$0xf]
    %v99 = vld [vmem:[%s2 + $0x44] sm:$0xf]
    %v100 = vld [vmem:[%s2 + $0x48] sm:$0xf]
    %v101 = vld [vmem:[%s2 + $0x4c] sm:$0xf]
    %v102 = vld [vmem:[%s2 + $0x50] sm:$0xf]
    %v103 = vld [vmem:[%s2 + $0x54] sm:$0xf]
    %v104 = vld [vmem:[%s2 + $0x58] sm:$0xf]
    %v105 = vld [vmem:[%s2 + $0x5c] sm:$0xf]
    %v106 = vld [vmem:[%s2 + $0x60] sm:$0xf]
    %v107 = vld [vmem:[%s2 + $0x64] sm:$0xf]
    %v108 = vld [vmem:[%s2 + $0x68] sm:$0xf]
    %v109 = vld [vmem:[%s2 + $0x6c] sm:$0xf]
    %v110 = vld [vmem:[%s2 + $0x70] sm:$0xf]
    %v111 = vld [vmem:[%s2 + $0x74] sm:$0xf]
    %v112 = vld [vmem:[%s2 + $0x78] sm:$0xf]
    %v113 = vld [vmem:[%s2 + $0x7c] sm:$0xf]
    %v114 = vld [vmem:[%s2 + $0x80] sm:$0xf]
    %v115 = vld [vmem:[%s2 + $0x84] sm:$0xf]
    %v116 = vld [vmem:[%s2 + $0x88] sm:$0xf]
    %v117 = vld [vmem:[%s2 + $0x8c] sm:$0xf]
    %v118 = vld [vmem:[%s3] sm:$0xf]
    %v119 = vld [vmem:[%s3 + $0x4] sm:$0xf]
    %v120 = vld [vmem:[%s3 + $0x8] sm:$0xf]
    %v121 = vld [vmem:[%s3 + $0xc] sm:$0xf]
    %v122 = vld [vmem:[%s3 + $0x10] sm:$0x3]
    %v123 = vlaneseq
    %v124 = vshrl.u32 %v123, 7
    %v125 = vsub.s32 0, %v124
    %v126 = vrot.slane %v44, %v125
    %v163 = vunpack.c.l.b16 %v82
    %v164 = vunpack.c.l.b16 %v83
    %v165 = vunpack.c.l.b16 %v84
    %v166 = vunpack.c.l.b16 %v85
    %v167 = vunpack.c.l.b16 %v86
    %v168 = vunpack.c.l.b16 %v87
    %v169 = vunpack.c.l.b16 %v88
    %v170 = vunpack.c.l.b16 %v89
    %v171 = vunpack.c.l.b16 %v90
    %v172 = vunpack.c.l.b16 %v91
    %v173 = vunpack.c.l.b16 %v92
    %v174 = vunpack.c.l.b16 %v93
    %v175 = vunpack.c.l.b16 %v94
    %v176 = vunpack.c.l.b16 %v95
    %v177 = vunpack.c.l.b16 %v96
    %v178 = vunpack.c.l.b16 %v97
    %v179 = vunpack.c.l.b16 %v98
    %v180 = vunpack.c.l.b16 %v99
    %v181 = vunpack.c.l.b16 %v100
    %v182 = vunpack.c.l.b16 %v101
    %v183 = vunpack.c.l.b16 %v102
    %v184 = vunpack.c.l.b16 %v103
    %v185 = vunpack.c.l.b16 %v104
    %v186 = vunpack.c.l.b16 %v105
    %v187 = vunpack.c.l.b16 %v106
    %v188 = vunpack.c.l.b16 %v107
    %v189 = vunpack.c.l.b16 %v108
    %v190 = vunpack.c.l.b16 %v109
    %v191 = vunpack.c.l.b16 %v110
    %v192 = vunpack.c.l.b16 %v111
    %v193 = vunpack.c.l.b16 %v112
    %v194 = vunpack.c.l.b16 %v113
    %v195 = vunpack.c.l.b16 %v114
    %v196 = vunpack.c.l.b16 %v115
    %v197 = vunpack.c.l.b16 %v116
    %v198 = vunpack.c.l.b16 %v117
    %v199 = vpack.c.b16 %v164, %v163
    %v200 = vpack.c.b16 %v166, %v165
    %v201 = vpack.c.b16 %v168, %v167
    %v202 = vpack.c.b16 %v170, %v169
    %v203 = vpack.c.b16 %v172, %v171
    %v204 = vpack.c.b16 %v174, %v173
    %v205 = vpack.c.b16 %v176, %v175
    %v206 = vpack.c.b16 %v178, %v177
    %v207 = vpack.c.b16 %v180, %v179
    %v208 = vpack.c.b16 %v182, %v181
    %v209 = vpack.c.b16 %v184, %v183
    %v210 = vpack.c.b16 %v186, %v185
    %v211 = vpack.c.b16 %v188, %v187
    %v212 = vpack.c.b16 %v190, %v189
    %v213 = vpack.c.b16 %v192, %v191
    %v214 = vpack.c.b16 %v194, %v193
    %v215 = vpack.c.b16 %v196, %v195
    %v216 = vpack.c.b16 %v198, %v197
    %v222 = vunpack.c.l.b16 %v118
    %v223 = vunpack.c.l.b16 %v119
    %v224 = vunpack.c.l.b16 %v120
    %v225 = vunpack.c.l.b16 %v121
    %v226 = vunpack.c.l.b16 %v122
    %v227 = vpack.c.b16 %v223, %v222
    %v228 = vpack.c.b16 %v225, %v224
    %v229 = vpack.c.b16 %v226, %v226
    %vm232 = vcmask 293888
    %v234 = vsel %vm232, %v199, 0
    %v237 = vsel %vm232, %v200, 0
    %v240 = vsel %vm232, %v201, 0
    %v243 = vsel %vm232, %v202, 0
    %v246 = vsel %vm232, %v203, 0
    %v249 = vsel %vm232, %v204, 0
    %v252 = vsel %vm232, %v205, 0
    %v255 = vsel %vm232, %v206, 0
    %v258 = vsel %vm232, %v207, 0
    %v261 = vsel %vm232, %v208, 0
    %v264 = vsel %vm232, %v209, 0
    %v267 = vsel %vm232, %v210, 0
    %v270 = vsel %vm232, %v211, 0
    %v273 = vsel %vm232, %v212, 0
    %v276 = vsel %vm232, %v213, 0
    %v279 = vsel %vm232, %v214, 0
    %v282 = vsel %vm232, %v215, 0
    %v285 = vsel %vm232, %v216, 0
    %vm287 = vcmask 1041408
    %v289 = vsel %vm287, %v229, 0
    %291 = vmatprep.subr.bf16.mxu0 0
    %292 = vmatpush1.bf16.msra.mxu0 0
    %293 = vmatprep.subr.bf16.mxu0 0
    %294 = vmatpush1.bf16.msra.mxu0 0
    %295 = vmatprep.subr.bf16.mxu0 0
    %296 = vmatpush1.bf16.msra.mxu0 0
    %297 = vmatprep.subr.bf16.mxu0 0
    %298 = vmatpush1.bf16.msra.mxu0 0
    %299 = vmatprep.subr.bf16.mxu0 0
    %300 = vmatpush1.bf16.msra.mxu0 0
    %301 = vmatprep.subr.bf16.mxu0 0
    %302 = vmatpush1.bf16.msra.mxu0 %v289
    %303 = vmatprep.subr.bf16.mxu0 0
    %304 = vmatpush1.bf16.msra.mxu0 %v228
    %305 = vmatprep.subr.bf16.mxu0 0
    %306 = vmatpush1.bf16.msra.mxu0 %v227
    %307 = vmatprep.subr.bf16.mxu0 0
    %308 = vmatpush2.bf16.msra.mxu0 0
    %309 = vmatprep.subr.bf16.mxu0 0
    %310 = vmatpush2.bf16.msra.mxu0 0
    %311 = vmatprep.subr.bf16.mxu0 0
    %312 = vmatpush2.bf16.msra.mxu0 0
    %313 = vmatprep.subr.bf16.mxu0 0
    %314 = vmatpush2.bf16.msra.mxu0 0
    %315 = vmatprep.subr.bf16.mxu0 0
    %316 = vmatpush2.bf16.msra.mxu0 0
    %317 = vmatprep.subr.bf16.mxu0 0
    %318 = vmatpush2.bf16.msra.mxu0 0
    %319 = vmatprep.subr.bf16.mxu0 0
    %320 = vmatpush2.bf16.msra.mxu0 0
    %321 = vmatprep.subr.bf16.mxu0 0
    %322 = vmatpush2.bf16.msra.mxu0 0
    %323 = vmatprep.mubr.bf16.mxu0 0
    %324 = vmatmul.mubr.bf16.gmra.mxu0 %v234
    %v325 = vpop.f32.mrf.mxu0
    %v326 = vadd.f32 %v126, %v325
    %v327 = vpop.f32.mrf.mxu0
    %v328 = vpop.f32.mrf.mxu0
    %v329 = vadd.f32 %v126, %v328
    %v330 = vpop.f32.mrf.mxu0
    %331 = vmatprep.mubr.bf16.mxu0 0
    %332 = vmatmul.mubr.bf16.gmra.mxu0 %v237
    %v333 = vpop.f32.mrf.mxu0
    %v334 = vadd.f32 %v126, %v333
    %v335 = vpop.f32.mrf.mxu0
    %v336 = vpop.f32.mrf.mxu0
    %v337 = vadd.f32 %v126, %v336
    %v338 = vpop.f32.mrf.mxu0
    %339 = vmatprep.mubr.bf16.mxu0 0
    %340 = vmatmul.mubr.bf16.gmra.mxu0 %v240
    %v341 = vpop.f32.mrf.mxu0
    %v342 = vadd.f32 %v126, %v341
    %v343 = vpop.f32.mrf.mxu0
    %v344 = vpop.f32.mrf.mxu0
    %v345 = vadd.f32 %v126, %v344
    %v346 = vpop.f32.mrf.mxu0
    %347 = vmatprep.mubr.bf16.mxu0 0
    %348 = vmatmul.mubr.bf16.gmra.mxu0 %v243
    %v349 = vpop.f32.mrf.mxu0
    %v350 = vadd.f32 %v126, %v349
    %v351 = vpop.f32.mrf.mxu0
    %v352 = vpop.f32.mrf.mxu0
    %v353 = vadd.f32 %v126, %v352
    %v354 = vpop.f32.mrf.mxu0
    %355 = vmatprep.mubr.bf16.mxu0 0
    %356 = vmatmul.mubr.bf16.gmra.mxu0 %v246
    %v357 = vpop.f32.mrf.mxu0
    %v358 = vadd.f32 %v126, %v357
    %v359 = vpop.f32.mrf.mxu0
    %v360 = vpop.f32.mrf.mxu0
    %v361 = vadd.f32 %v126, %v360
    %v362 = vpop.f32.mrf.mxu0
    %363 = vmatprep.mubr.bf16.mxu0 0
    %364 = vmatmul.mubr.bf16.gmra.mxu0 %v249
    %v365 = vpop.f32.mrf.mxu0
    %v366 = vadd.f32 %v126, %v365
    %v367 = vpop.f32.mrf.mxu0
    %v368 = vpop.f32.mrf.mxu0
    %v369 = vadd.f32 %v126, %v368
    %v370 = vpop.f32.mrf.mxu0
    %371 = vmatprep.mubr.bf16.mxu0 0
    %372 = vmatmul.mubr.bf16.gmra.mxu0 %v252
    %v373 = vpop.f32.mrf.mxu0
    %v374 = vadd.f32 %v126, %v373
    %v375 = vpop.f32.mrf.mxu0
    %v376 = vpop.f32.mrf.mxu0
    %v377 = vadd.f32 %v126, %v376
    %v378 = vpop.f32.mrf.mxu0
    %379 = vmatprep.mubr.bf16.mxu0 0
    %380 = vmatmul.mubr.bf16.gmra.mxu0 %v255
    %v381 = vpop.f32.mrf.mxu0
    %v382 = vadd.f32 %v126, %v381
    %v383 = vpop.f32.mrf.mxu0
    %v384 = vpop.f32.mrf.mxu0
    %v385 = vadd.f32 %v126, %v384
    %v386 = vpop.f32.mrf.mxu0
    %387 = vmatprep.mubr.bf16.mxu0 0
    %388 = vmatmul.mubr.bf16.gmra.mxu0 %v258
    %v389 = vpop.f32.mrf.mxu0
    %v390 = vadd.f32 %v126, %v389
    %v391 = vpop.f32.mrf.mxu0
    %v392 = vpop.f32.mrf.mxu0
    %v393 = vadd.f32 %v126, %v392
    %v394 = vpop.f32.mrf.mxu0
    %395 = vmatprep.mubr.bf16.mxu0 0
    %396 = vmatmul.mubr.bf16.gmra.mxu0 %v261
    %v397 = vpop.f32.mrf.mxu0
    %v398 = vadd.f32 %v126, %v397
    %v399 = vpop.f32.mrf.mxu0
    %v400 = vpop.f32.mrf.mxu0
    %v401 = vadd.f32 %v126, %v400
    %v402 = vpop.f32.mrf.mxu0
    %403 = vmatprep.mubr.bf16.mxu0 0
    %404 = vmatmul.mubr.bf16.gmra.mxu0 %v264
    %v405 = vpop.f32.mrf.mxu0
    %v406 = vadd.f32 %v126, %v405
    %v407 = vpop.f32.mrf.mxu0
    %v408 = vpop.f32.mrf.mxu0
    %v409 = vadd.f32 %v126, %v408
    %v410 = vpop.f32.mrf.mxu0
    %411 = vmatprep.mubr.bf16.mxu0 0
    %412 = vmatmul.mubr.bf16.gmra.mxu0 %v267
    %v413 = vpop.f32.mrf.mxu0
    %v414 = vadd.f32 %v126, %v413
    %v415 = vpop.f32.mrf.mxu0
    %v416 = vpop.f32.mrf.mxu0
    %v417 = vadd.f32 %v126, %v416
    %v418 = vpop.f32.mrf.mxu0
    %419 = vmatprep.mubr.bf16.mxu0 0
    %420 = vmatmul.mubr.bf16.gmra.mxu0 %v270
    %v421 = vpop.f32.mrf.mxu0
    %v422 = vadd.f32 %v126, %v421
    %v423 = vpop.f32.mrf.mxu0
    %v424 = vpop.f32.mrf.mxu0
    %v425 = vadd.f32 %v126, %v424
    %v426 = vpop.f32.mrf.mxu0
    %427 = vmatprep.mubr.bf16.mxu0 0
    %428 = vmatmul.mubr.bf16.gmra.mxu0 %v273
    %v429 = vpop.f32.mrf.mxu0
    %v430 = vadd.f32 %v126, %v429
    %v431 = vpop.f32.mrf.mxu0
    %v432 = vpop.f32.mrf.mxu0
    %v433 = vadd.f32 %v126, %v432
    %v434 = vpop.f32.mrf.mxu0
    %435 = vmatprep.mubr.bf16.mxu0 0
    %436 = vmatmul.mubr.bf16.gmra.mxu0 %v276
    %v437 = vpop.f32.mrf.mxu0
    %v438 = vadd.f32 %v126, %v437
    %v439 = vpop.f32.mrf.mxu0
    %v440 = vpop.f32.mrf.mxu0
    %v441 = vadd.f32 %v126, %v440
    %v442 = vpop.f32.mrf.mxu0
    %443 = vmatprep.mubr.bf16.mxu0 0
    %444 = vmatmul.mubr.bf16.gmra.mxu0 %v279
    %v445 = vpop.f32.mrf.mxu0
    %v446 = vadd.f32 %v126, %v445
    %v447 = vpop.f32.mrf.mxu0
    %v448 = vpop.f32.mrf.mxu0
    %v449 = vadd.f32 %v126, %v448
    %v450 = vpop.f32.mrf.mxu0
    %451 = vmatprep.mubr.bf16.mxu0 0
    %452 = vmatmul.mubr.bf16.gmra.mxu0 %v282
    %v453 = vpop.f32.mrf.mxu0
    %v454 = vadd.f32 %v126, %v453
    %v455 = vpop.f32.mrf.mxu0
    %v456 = vpop.f32.mrf.mxu0
    %v457 = vadd.f32 %v126, %v456
    %v458 = vpop.f32.mrf.mxu0
    %459 = vmatprep.mubr.bf16.mxu0 0
    %460 = vmatmul.mubr.bf16.gmra.mxu0 %v285
    %v461 = vpop.f32.mrf.mxu0
    %v462 = vadd.f32 %v126, %v461
    %v463 = vpop.f32.mrf.mxu0
    %v464 = vpop.f32.mrf.mxu0
    %v465 = vadd.f32 %v126, %v464
    %v466 = vpop.f32.mrf.mxu0
    %467 = vdwg.mxu0
    %v468 = vmax.f32 %v326, 0.0
    %v469 = vmax.f32 %v329, 0.0
    %v470 = vmax.f32 %v334, 0.0
    %v471 = vmax.f32 %v337, 0.0
    %v472 = vmax.f32 %v342, 0.0
    %v473 = vmax.f32 %v345, 0.0
    %v474 = vmax.f32 %v350, 0.0
    %v475 = vmax.f32 %v353, 0.0
    %v476 = vmax.f32 %v358, 0.0
    %v477 = vmax.f32 %v361, 0.0
    %v478 = vmax.f32 %v366, 0.0
    %v479 = vmax.f32 %v369, 0.0
    %v480 = vmax.f32 %v374, 0.0
    %v481 = vmax.f32 %v377, 0.0
    %v482 = vmax.f32 %v382, 0.0
    %v483 = vmax.f32 %v385, 0.0
    %v484 = vmax.f32 %v390, 0.0
    %v485 = vmax.f32 %v393, 0.0
    %v486 = vmax.f32 %v398, 0.0
    %v487 = vmax.f32 %v401, 0.0
    %v488 = vmax.f32 %v406, 0.0
    %v489 = vmax.f32 %v409, 0.0
    %v490 = vmax.f32 %v414, 0.0
    %v491 = vmax.f32 %v417, 0.0
    %v492 = vmax.f32 %v422, 0.0
    %v493 = vmax.f32 %v425, 0.0
    %v494 = vmax.f32 %v430, 0.0
    %v495 = vmax.f32 %v433, 0.0
    %v496 = vmax.f32 %v438, 0.0
    %v497 = vmax.f32 %v441, 0.0
    %v498 = vmax.f32 %v446, 0.0
    %v499 = vmax.f32 %v449, 0.0
    %v500 = vmax.f32 %v454, 0.0
    %v501 = vmax.f32 %v457, 0.0
    %v502 = vmax.f32 %v462, 0.0
    %v503 = vmax.f32 %v465, 0.0
    %v504 = vmax.f32 %v468, %v477
    %v505 = vmax.f32 %v469, %v478
    %v506 = vmax.f32 %v470, %v479
    %v507 = vmax.f32 %v471, %v480
    %v508 = vmax.f32 %v472, %v481
    %v509 = vmax.f32 %v473, %v482
    %v510 = vmax.f32 %v474, %v483
    %v511 = vmax.f32 %v475, %v484
    %v512 = vmax.f32 %v476, %v485
    %v513 = vmax.f32 %v486, %v495
    %v514 = vmax.f32 %v487, %v496
    %v515 = vmax.f32 %v488, %v497
    %v516 = vmax.f32 %v489, %v498
    %v517 = vmax.f32 %v490, %v499
    %v518 = vmax.f32 %v491, %v500
    %v519 = vmax.f32 %v492, %v501
    %v520 = vmax.f32 %v493, %v502
    %v521 = vmax.f32 %v494, %v503
    %v522 = vmax.f32 %v504, %v513
    %v523 = vmax.f32 %v505, %v514
    %v524 = vmax.f32 %v506, %v515
    %v525 = vmax.f32 %v507, %v516
    %v526 = vmax.f32 %v508, %v517
    %v527 = vmax.f32 %v509, %v518
    %v528 = vmax.f32 %v510, %v519
    %v529 = vmax.f32 %v511, %v520
    %v530 = vmax.f32 %v512, %v521
    %v531 = vlaneseq
    %v532 = vshrl.u32 %v531, 7
    %v533 = vadd.s32 %v532, 8
    %v534 = vadd.s32 %v532, 16
    %v535 = vadd.s32 %v532, 24
    %v536 = vadd.s32 %v532, 32
    %v537 = vadd.s32 %v532, 40
    %v538 = vadd.s32 %v532, 48
    %v539 = vadd.s32 %v532, 56
    %v540 = vadd.s32 %v532, 64
    %v541 = vshra.s32 %v532, 3
    %v542 = vshra.s32 %v533, 3
    %v543 = vshra.s32 %v534, 3
    %v544 = vshra.s32 %v535, 3
    %v545 = vshra.s32 %v536, 3
    %v546 = vshra.s32 %v537, 3
    %v547 = vshra.s32 %v538, 3
    %v548 = vshra.s32 %v539, 3
    %v549 = vshra.s32 %v540, 3
    %v550 = vand.u32 %v532, 7
    %v551 = vand.u32 %v533, 7
    %v552 = vand.u32 %v534, 7
    %v553 = vand.u32 %v535, 7
    %v554 = vand.u32 %v536, 7
    %v555 = vand.u32 %v537, 7
    %v556 = vand.u32 %v538, 7
    %v557 = vand.u32 %v539, 7
    %v558 = vand.u32 %v540, 7
    %vm559 = vcmp.ge.s32.totalorder %v541, 1
    %vm560 = vcmp.ge.s32.totalorder %v542, 1
    %vm561 = vcmp.ge.s32.totalorder %v543, 1
    %vm562 = vcmp.ge.s32.totalorder %v544, 1
    %vm563 = vcmp.ge.s32.totalorder %v545, 1
    %vm564 = vcmp.ge.s32.totalorder %v546, 1
    %vm565 = vcmp.ge.s32.totalorder %v547, 1
    %vm566 = vcmp.ge.s32.totalorder %v548, 1
    %vm567 = vcmp.ge.s32.totalorder %v549, 1
    %vm568 = vcmp.le.s32.totalorder %v541, 6
    %vm569 = vcmp.le.s32.totalorder %v542, 6
    %vm570 = vcmp.le.s32.totalorder %v543, 6
    %vm571 = vcmp.le.s32.totalorder %v544, 6
    %vm572 = vcmp.le.s32.totalorder %v545, 6
    %vm573 = vcmp.le.s32.totalorder %v546, 6
    %vm574 = vcmp.le.s32.totalorder %v547, 6
    %vm575 = vcmp.le.s32.totalorder %v548, 6
    %vm576 = vcmp.le.s32.totalorder %v549, 6
    %vm577 = vmand %vm559, %vm568
    %vm578 = vmand %vm560, %vm569
    %vm579 = vmand %vm561, %vm570
    %vm580 = vmand %vm562, %vm571
    %vm581 = vmand %vm563, %vm572
    %vm582 = vmand %vm564, %vm573
    %vm583 = vmand %vm565, %vm574
    %vm584 = vmand %vm566, %vm575
    %vm585 = vmand %vm567, %vm576
    %vm586 = vcmp.ge.s32.totalorder %v550, 1
    %vm587 = vcmp.ge.s32.totalorder %v551, 1
    %vm588 = vcmp.ge.s32.totalorder %v552, 1
    %vm589 = vcmp.ge.s32.totalorder %v553, 1
    %vm590 = vcmp.ge.s32.totalorder %v554, 1
    %vm591 = vcmp.ge.s32.totalorder %v555, 1
    %vm592 = vcmp.ge.s32.totalorder %v556, 1
    %vm593 = vcmp.ge.s32.totalorder %v557, 1
    %vm594 = vcmp.ge.s32.totalorder %v558, 1
    %vm595 = vmand %vm577, %vm586
    %vm596 = vmand %vm578, %vm587
    %vm597 = vmand %vm579, %vm588
    %vm598 = vmand %vm580, %vm589
    %vm599 = vmand %vm581, %vm590
    %vm600 = vmand %vm582, %vm591
    %vm601 = vmand %vm583, %vm592
    %vm602 = vmand %vm584, %vm593
    %vm603 = vmand %vm585, %vm594
    %vm604 = vcmp.le.s32.totalorder %v550, 6
    %vm605 = vcmp.le.s32.totalorder %v551, 6
    %vm606 = vcmp.le.s32.totalorder %v552, 6
    %vm607 = vcmp.le.s32.totalorder %v553, 6
    %vm608 = vcmp.le.s32.totalorder %v554, 6
    %vm609 = vcmp.le.s32.totalorder %v555, 6
    %vm610 = vcmp.le.s32.totalorder %v556, 6
    %vm611 = vcmp.le.s32.totalorder %v557, 6
    %vm612 = vcmp.le.s32.totalorder %v558, 6
    %vm613 = vmand %vm595, %vm604
    %vm614 = vmand %vm596, %vm605
    %vm615 = vmand %vm597, %vm606
    %vm616 = vmand %vm598, %vm607
    %vm617 = vmand %vm599, %vm608
    %vm618 = vmand %vm600, %vm609
    %vm619 = vmand %vm601, %vm610
    %vm620 = vmand %vm602, %vm611
    %vm621 = vmand %vm603, %vm612
    %v622 = vsel %vm613, 1, 0
    %v623 = vsel %vm614, 1, 0
    %v624 = vsel %vm615, 1, 0
    %v625 = vsel %vm616, 1, 0
    %v626 = vsel %vm617, 1, 0
    %v627 = vsel %vm618, 1, 0
    %v628 = vsel %vm619, 1, 0
    %v629 = vsel %vm620, 1, 0
    %v630 = vsel %vm621, 1, 0
    %v631 = vcvt.s32.f32 %v622
    %v632 = vcvt.s32.f32 %v623
    %v633 = vcvt.s32.f32 %v624
    %v634 = vcvt.s32.f32 %v625
    %v635 = vcvt.s32.f32 %v626
    %v636 = vcvt.s32.f32 %v627
    %v637 = vcvt.s32.f32 %v628
    %v638 = vcvt.s32.f32 %v629
    %v639 = vcvt.s32.f32 %v630
    %v640 = vmul.f32 %v522, %v631
    %v641 = vmul.f32 %v523, %v632
    %v642 = vmul.f32 %v524, %v633
    %v643 = vmul.f32 %v525, %v634
    %v644 = vmul.f32 %v526, %v635
    %v645 = vmul.f32 %v527, %v636
    %v646 = vmul.f32 %v528, %v637
    %v647 = vmul.f32 %v529, %v638
    %v648 = vmul.f32 %v530, %v639
    %v649 = vpack.c.bf16 %v641, %v640
    %v650 = vpack.c.bf16 %v643, %v642
    %v651 = vpack.c.bf16 %v645, %v644
    %v652 = vld [vmem:[%s4] sm:$0xf]
    %v653 = vld [vmem:[%s4 + $0x4] sm:$0xf]
    %v654 = vld [vmem:[%s4 + $0x8] sm:$0xf]
    %v655 = vld [vmem:[%s4 + $0xc] sm:$0xf]
    %v656 = vpack.c.bf16 %v646, %v646
    %v657 = vld [vmem:[%s4 + $0x10] sm:$0xf]
    %v658 = vld [vmem:[%s4 + $0x14] sm:$0xf]
    %v659 = vld [vmem:[%s4 + $0x18] sm:$0xf]
    %v660 = vld [vmem:[%s4 + $0x1c] sm:$0xf]
    %vm661 = vsmask.f32 7424
    %v663 = vshrl.u32 %v649, 16
    %v665 = vshll.u32 %v649, 16
    %v667 = vrot.slane %v665, 1
    %v668 = vor.u32 %v663, %v667
    %v670 = vshll.u32 %v650, 16
    %v672 = vrot.slane %v670, 1
    %v673 = vsel %vm661, %v668, %v672
    %v674 = vshrl.u32 %v650, 16
    %v676 = vor.u32 %v674, %v672
    %v678 = vshll.u32 %v651, 16
    %v680 = vrot.slane %v678, 1
    %v681 = vsel %vm661, %v676, %v680
    %v682 = vshrl.u32 %v651, 16
    %v684 = vor.u32 %v682, %v680
    %v686 = vshll.u32 %v656, 16
    %v688 = vrot.slane %v686, 1
    %v689 = vsel %vm661, %v684, %v688
    %v694 = vunpack.c.l.b16 %v657
    %v695 = vunpack.c.l.b16 %v658
    %v696 = vunpack.c.l.b16 %v659
    %v697 = vunpack.c.l.b16 %v660
    %v698 = vpack.c.b16 %v695, %v694
    %v699 = vpack.c.b16 %v697, %v696
    %vm702 = vcmask 261120
    %v704 = vsel %vm702, %v673, 0
    %v707 = vsel %vm702, %v681, 0
    %v710 = vsel %vm702, %v689, 0
    %712 = vmatprep.subr.bf16.mxu0 0
    %713 = vmatpush1.bf16.msra.mxu0 0
    %714 = vmatprep.subr.bf16.mxu0 0
    %715 = vmatpush1.bf16.msra.mxu0 0
    %716 = vmatprep.subr.bf16.mxu0 0
    %717 = vmatpush1.bf16.msra.mxu0 0
    %718 = vmatprep.subr.bf16.mxu0 0
    %719 = vmatpush1.bf16.msra.mxu0 0
    %720 = vmatprep.subr.bf16.mxu0 0
    %721 = vmatpush1.bf16.msra.mxu0 0
    %722 = vmatprep.subr.bf16.mxu0 0
    %723 = vmatpush1.bf16.msra.mxu0 0
    %724 = vmatprep.subr.bf16.mxu0 0
    %725 = vmatpush1.bf16.msra.mxu0 %v699
    %726 = vmatprep.subr.bf16.mxu0 0
    %727 = vmatpush1.bf16.msra.mxu0 %v698
    %728 = vmatprep.subr.bf16.mxu0 0
    %729 = vmatpush2.bf16.msra.mxu0 0
    %730 = vmatprep.subr.bf16.mxu0 0
    %731 = vmatpush2.bf16.msra.mxu0 0
    %732 = vmatprep.subr.bf16.mxu0 0
    %733 = vmatpush2.bf16.msra.mxu0 0
    %734 = vmatprep.subr.bf16.mxu0 0
    %735 = vmatpush2.bf16.msra.mxu0 0
    %736 = vmatprep.subr.bf16.mxu0 0
    %737 = vmatpush2.bf16.msra.mxu0 0
    %738 = vmatprep.subr.bf16.mxu0 0
    %739 = vmatpush2.bf16.msra.mxu0 0
    %740 = vmatprep.subr.bf16.mxu0 0
    %741 = vmatpush2.bf16.msra.mxu0 0
    %742 = vmatprep.subr.bf16.mxu0 0
    %743 = vmatpush2.bf16.msra.mxu0 0
    %744 = vmatprep.mubr.bf16.mxu0 0
    %745 = vmatmul.mubr.bf16.gmra.mxu0 %v704
    %v746 = vpop.f32.mrf.mxu0
    %v747 = vadd.f32 0.0, %v746
    %v748 = vpop.f32.mrf.mxu0
    %v749 = vpop.f32.mrf.mxu0
    %v750 = vadd.f32 0.0, %v749
    %v751 = vpop.f32.mrf.mxu0
    %752 = vmatprep.mubr.bf16.mxu0 0
    %753 = vmatmul.mubr.bf16.gmra.mxu0 %v707
    %v754 = vpop.f32.mrf.mxu0
    %v755 = vadd.f32 0.0, %v754
    %v756 = vpop.f32.mrf.mxu0
    %v757 = vpop.f32.mrf.mxu0
    %v758 = vadd.f32 0.0, %v757
    %v759 = vpop.f32.mrf.mxu0
    %760 = vmatprep.mubr.bf16.mxu0 0
    %761 = vmatmul.mubr.bf16.gmra.mxu0 %v710
    %v762 = vpop.f32.mrf.mxu0
    %v763 = vadd.f32 0.0, %v762
    %v764 = vpop.f32.mrf.mxu0
    %v765 = vpop.f32.mrf.mxu0
    %v766 = vadd.f32 0.0, %v765
    %v767 = vpop.f32.mrf.mxu0
    %768 = vdwg.mxu0
    %v773 = vunpack.c.l.b16 %v652
    %v774 = vunpack.c.l.b16 %v653
    %v775 = vunpack.c.l.b16 %v654
    %v776 = vunpack.c.l.b16 %v655
    %v777 = vpack.c.b16 %v774, %v773
    %v778 = vpack.c.b16 %v776, %v775
    %v781 = vsel %vm702, %v649, 0
    %v783 = vsel %vm702, %v650, 0
    %v785 = vsel %vm702, %v651, 0
    %787 = vmatprep.subr.bf16.mxu0 0
    %788 = vmatpush1.bf16.msra.mxu0 0
    %789 = vmatprep.subr.bf16.mxu0 0
    %790 = vmatpush1.bf16.msra.mxu0 0
    %791 = vmatprep.subr.bf16.mxu0 0
    %792 = vmatpush1.bf16.msra.mxu0 0
    %793 = vmatprep.subr.bf16.mxu0 0
    %794 = vmatpush1.bf16.msra.mxu0 0
    %795 = vmatprep.subr.bf16.mxu0 0
    %796 = vmatpush1.bf16.msra.mxu0 0
    %797 = vmatprep.subr.bf16.mxu0 0
    %798 = vmatpush1.bf16.msra.mxu0 0
    %799 = vmatprep.subr.bf16.mxu0 0
    %800 = vmatpush1.bf16.msra.mxu0 %v778
    %801 = vmatprep.subr.bf16.mxu0 0
    %802 = vmatpush1.bf16.msra.mxu0 %v777
    %803 = vmatprep.subr.bf16.mxu0 0
    %804 = vmatpush2.bf16.msra.mxu0 0
    %805 = vmatprep.subr.bf16.mxu0 0
    %806 = vmatpush2.bf16.msra.mxu0 0
    %807 = vmatprep.subr.bf16.mxu0 0
    %808 = vmatpush2.bf16.msra.mxu0 0
    %809 = vmatprep.subr.bf16.mxu0 0
    %810 = vmatpush2.bf16.msra.mxu0 0
    %811 = vmatprep.subr.bf16.mxu0 0
    %812 = vmatpush2.bf16.msra.mxu0 0
    %813 = vmatprep.subr.bf16.mxu0 0
    %814 = vmatpush2.bf16.msra.mxu0 0
    %815 = vmatprep.subr.bf16.mxu0 0
    %816 = vmatpush2.bf16.msra.mxu0 0
    %817 = vmatprep.subr.bf16.mxu0 0
    %818 = vmatpush2.bf16.msra.mxu0 0
    %819 = vmatprep.mubr.bf16.mxu0 0
    %820 = vmatmul.mubr.bf16.gmra.mxu0 %v781
    %v821 = vpop.f32.mrf.mxu0
    %v822 = vadd.f32 %v747, %v821
    %v823 = vpop.f32.mrf.mxu0
    %v824 = vpop.f32.mrf.mxu0
    %v825 = vadd.f32 %v750, %v824
    %v826 = vpop.f32.mrf.mxu0
    %827 = vmatprep.mubr.bf16.mxu0 0
    %828 = vmatmul.mubr.bf16.gmra.mxu0 %v783
    %v829 = vpop.f32.mrf.mxu0
    %v830 = vadd.f32 %v755, %v829
    %v831 = vpop.f32.mrf.mxu0
    %v832 = vpop.f32.mrf.mxu0
    %v833 = vadd.f32 %v758, %v832
    %v834 = vpop.f32.mrf.mxu0
    %835 = vmatprep.mubr.bf16.mxu0 0
    %836 = vmatmul.mubr.bf16.gmra.mxu0 %v785
    %v837 = vpop.f32.mrf.mxu0
    %v838 = vadd.f32 %v763, %v837
    %v839 = vpop.f32.mrf.mxu0
    %v840 = vpop.f32.mrf.mxu0
    %v841 = vadd.f32 %v766, %v840
    %v842 = vpop.f32.mrf.mxu0
    %843 = vdwg.mxu0
    %v844 = vld [vmem:[%s4 + $0x20] sm:$0xf]
    %v845 = vld [vmem:[%s4 + $0x24] sm:$0xf]
    %v846 = vld [vmem:[%s4 + $0x28] sm:$0xf]
    %v847 = vld [vmem:[%s4 + $0x2c] sm:$0xf]
    %vm852 = vcmask 1046528
    %v853 = vrot.slane %v649, 1
    %v854 = vrot.slane %v650, 1
    %v855 = vsel %vm852, %v853, %v854
    %v856 = vrot.slane %v651, 1
    %v857 = vsel %vm852, %v854, %v856
    %v858 = vrot.slane %v656, 1
    %v859 = vsel %vm852, %v856, %v858
    %v864 = vunpack.c.l.b16 %v844
    %v865 = vunpack.c.l.b16 %v845
    %v866 = vunpack.c.l.b16 %v846
    %v867 = vunpack.c.l.b16 %v847
    %v868 = vpack.c.b16 %v865, %v864
    %v869 = vpack.c.b16 %v867, %v866
    %v873 = vsel %vm702, %v855, 0
    %v876 = vsel %vm702, %v857, 0
    %v879 = vsel %vm702, %v859, 0
    %881 = vmatprep.subr.bf16.mxu0 0
    %882 = vmatpush1.bf16.msra.mxu0 0
    %883 = vmatprep.subr.bf16.mxu0 0
    %884 = vmatpush1.bf16.msra.mxu0 0
    %885 = vmatprep.subr.bf16.mxu0 0
    %886 = vmatpush1.bf16.msra.mxu0 0
    %887 = vmatprep.subr.bf16.mxu0 0
    %888 = vmatpush1.bf16.msra.mxu0 0
    %889 = vmatprep.subr.bf16.mxu0 0
    %890 = vmatpush1.bf16.msra.mxu0 0
    %891 = vmatprep.subr.bf16.mxu0 0
    %892 = vmatpush1.bf16.msra.mxu0 0
    %893 = vmatprep.subr.bf16.mxu0 0
    %894 = vmatpush1.bf16.msra.mxu0 %v869
    %895 = vmatprep.subr.bf16.mxu0 0
    %896 = vmatpush1.bf16.msra.mxu0 %v868
    %897 = vmatprep.subr.bf16.mxu0 0
    %898 = vmatpush2.bf16.msra.mxu0 0
    %899 = vmatprep.subr.bf16.mxu0 0
    %900 = vmatpush2.bf16.msra.mxu0 0
    %901 = vmatprep.subr.bf16.mxu0 0
    %902 = vmatpush2.bf16.msra.mxu0 0
    %903 = vmatprep.subr.bf16.mxu0 0
    %904 = vmatpush2.bf16.msra.mxu0 0
    %905 = vmatprep.subr.bf16.mxu0 0
    %906 = vmatpush2.bf16.msra.mxu0 0
    %907 = vmatprep.subr.bf16.mxu0 0
    %908 = vmatpush2.bf16.msra.mxu0 0
    %909 = vmatprep.subr.bf16.mxu0 0
    %910 = vmatpush2.bf16.msra.mxu0 0
    %911 = vmatprep.subr.bf16.mxu0 0
    %912 = vmatpush2.bf16.msra.mxu0 0
    %913 = vmatprep.mubr.bf16.mxu0 0
    %914 = vmatmul.mubr.bf16.gmra.mxu0 %v873
    %v915 = vpop.f32.mrf.mxu0
    %v916 = vadd.f32 0.0, %v915
    %v917 = vpop.f32.mrf.mxu0
    %v918 = vpop.f32.mrf.mxu0
    %v919 = vadd.f32 0.0, %v918
    %v920 = vpop.f32.mrf.mxu0
    %921 = vmatprep.mubr.bf16.mxu0 0
    %922 = vmatmul.mubr.bf16.gmra.mxu0 %v876
    %v923 = vpop.f32.mrf.mxu0
    %v924 = vadd.f32 0.0, %v923
    %v925 = vpop.f32.mrf.mxu0
    %v926 = vpop.f32.mrf.mxu0
    %v927 = vadd.f32 0.0, %v926
    %v928 = vpop.f32.mrf.mxu0
    %929 = vmatprep.mubr.bf16.mxu0 0
    %930 = vmatmul.mubr.bf16.gmra.mxu0 %v879
    %v931 = vpop.f32.mrf.mxu0
    %v932 = vadd.f32 0.0, %v931
    %v933 = vpop.f32.mrf.mxu0
    %v934 = vpop.f32.mrf.mxu0
    %v935 = vadd.f32 0.0, %v934
    %v936 = vpop.f32.mrf.mxu0
    %937 = vdwg.mxu0
    %v938 = vadd.f32 %v822, %v916
    %v939 = vadd.f32 %v825, %v919
    %v940 = vadd.f32 %v830, %v924
    %v941 = vadd.f32 %v833, %v927
    %v942 = vadd.f32 %v838, %v932
    %v943 = vadd.f32 %v841, %v935
    %v944 = vpack.c.bf16 %v642, %v641
    %v945 = vpack.c.bf16 %v644, %v643
    %v946 = vpack.c.bf16 %v646, %v645
    %v947 = vld [vmem:[%s4 + $0x30] sm:$0xf]
    %v948 = vld [vmem:[%s4 + $0x34] sm:$0xf]
    %v949 = vld [vmem:[%s4 + $0x38] sm:$0xf]
    %v950 = vld [vmem:[%s4 + $0x3c] sm:$0xf]
    %v955 = vunpack.c.l.b16 %v947
    %v956 = vunpack.c.l.b16 %v948
    %v957 = vunpack.c.l.b16 %v949
    %v958 = vunpack.c.l.b16 %v950
    %v959 = vpack.c.b16 %v956, %v955
    %v960 = vpack.c.b16 %v958, %v957
    %v964 = vsel %vm702, %v944, 0
    %v967 = vsel %vm702, %v945, 0
    %v970 = vsel %vm702, %v946, 0
    %972 = vmatprep.subr.bf16.mxu0 0
    %973 = vmatpush1.bf16.msra.mxu0 0
    %974 = vmatprep.subr.bf16.mxu0 0
    %975 = vmatpush1.bf16.msra.mxu0 0
    %976 = vmatprep.subr.bf16.mxu0 0
    %977 = vmatpush1.bf16.msra.mxu0 0
    %978 = vmatprep.subr.bf16.mxu0 0
    %979 = vmatpush1.bf16.msra.mxu0 0
    %980 = vmatprep.subr.bf16.mxu0 0
    %981 = vmatpush1.bf16.msra.mxu0 0
    %982 = vmatprep.subr.bf16.mxu0 0
    %983 = vmatpush1.bf16.msra.mxu0 0
    %984 = vmatprep.subr.bf16.mxu0 0
    %985 = vmatpush1.bf16.msra.mxu0 %v960
    %986 = vmatprep.subr.bf16.mxu0 0
    %987 = vmatpush1.bf16.msra.mxu0 %v959
    %988 = vmatprep.subr.bf16.mxu0 0
    %989 = vmatpush2.bf16.msra.mxu0 0
    %990 = vmatprep.subr.bf16.mxu0 0
    %991 = vmatpush2.bf16.msra.mxu0 0
    %992 = vmatprep.subr.bf16.mxu0 0
    %993 = vmatpush2.bf16.msra.mxu0 0
    %994 = vmatprep.subr.bf16.mxu0 0
    %995 = vmatpush2.bf16.msra.mxu0 0
    %996 = vmatprep.subr.bf16.mxu0 0
    %997 = vmatpush2.bf16.msra.mxu0 0
    %998 = vmatprep.subr.bf16.mxu0 0
    %999 = vmatpush2.bf16.msra.mxu0 0
    %1000 = vmatprep.subr.bf16.mxu0 0
    %1001 = vmatpush2.bf16.msra.mxu0 0
    %1002 = vmatprep.subr.bf16.mxu0 0
    %1003 = vmatpush2.bf16.msra.mxu0 0
    %1004 = vmatprep.mubr.bf16.mxu0 0
    %1005 = vmatmul.mubr.bf16.gmra.mxu0 %v964
    %v1006 = vpop.f32.mrf.mxu0
    %v1007 = vadd.f32 0.0, %v1006
    %v1008 = vpop.f32.mrf.mxu0
    %v1009 = vpop.f32.mrf.mxu0
    %v1010 = vadd.f32 0.0, %v1009
    %v1011 = vpop.f32.mrf.mxu0
    %1012 = vmatprep.mubr.bf16.mxu0 0
    %1013 = vmatmul.mubr.bf16.gmra.mxu0 %v967
    %v1014 = vpop.f32.mrf.mxu0
    %v1015 = vadd.f32 0.0, %v1014
    %v1016 = vpop.f32.mrf.mxu0
    %v1017 = vpop.f32.mrf.mxu0
    %v1018 = vadd.f32 0.0, %v1017
    %v1019 = vpop.f32.mrf.mxu0
    %1020 = vmatprep.mubr.bf16.mxu0 0
    %1021 = vmatmul.mubr.bf16.gmra.mxu0 %v970
    %v1022 = vpop.f32.mrf.mxu0
    %v1023 = vadd.f32 0.0, %v1022
    %v1024 = vpop.f32.mrf.mxu0
    %v1025 = vpop.f32.mrf.mxu0
    %v1026 = vadd.f32 0.0, %v1025
    %v1027 = vpop.f32.mrf.mxu0
    %1028 = vdwg.mxu0
    %v1029 = vadd.f32 %v938, %v1007
    %v1030 = vadd.f32 %v939, %v1010
    %v1031 = vadd.f32 %v940, %v1015
    %v1032 = vadd.f32 %v941, %v1018
    %v1033 = vadd.f32 %v942, %v1023
    %v1034 = vadd.f32 %v943, %v1026
    %v1035 = vpack.c.bf16 %v647, %v647
    %v1036 = vld [vmem:[%s4 + $0x40] sm:$0xf]
    %v1037 = vld [vmem:[%s4 + $0x44] sm:$0xf]
    %v1038 = vld [vmem:[%s4 + $0x48] sm:$0xf]
    %v1039 = vld [vmem:[%s4 + $0x4c] sm:$0xf]
    %v1040 = vshrl.u32 %v944, 16
    %v1042 = vshll.u32 %v944, 16
    %v1044 = vrot.slane %v1042, 1
    %v1045 = vor.u32 %v1040, %v1044
    %v1046 = vshll.u32 %v945, 16
    %v1048 = vrot.slane %v1046, 1
    %v1049 = vsel %vm661, %v1045, %v1048
    %v1050 = vshrl.u32 %v945, 16
    %v1052 = vor.u32 %v1050, %v1048
    %v1053 = vshll.u32 %v946, 16
    %v1055 = vrot.slane %v1053, 1
    %v1056 = vsel %vm661, %v1052, %v1055
    %v1057 = vshrl.u32 %v946, 16
    %v1059 = vor.u32 %v1057, %v1055
    %v1061 = vshll.u32 %v1035, 16
    %v1063 = vrot.slane %v1061, 1
    %v1064 = vsel %vm661, %v1059, %v1063
    %v1069 = vunpack.c.l.b16 %v1036
    %v1070 = vunpack.c.l.b16 %v1037
    %v1071 = vunpack.c.l.b16 %v1038
    %v1072 = vunpack.c.l.b16 %v1039
    %v1073 = vpack.c.b16 %v1070, %v1069
    %v1074 = vpack.c.b16 %v1072, %v1071
    %v1078 = vsel %vm702, %v1049, 0
    %v1081 = vsel %vm702, %v1056, 0
    %v1084 = vsel %vm702, %v1064, 0
    %1086 = vmatprep.subr.bf16.mxu0 0
    %1087 = vmatpush1.bf16.msra.mxu0 0
    %1088 = vmatprep.subr.bf16.mxu0 0
    %1089 = vmatpush1.bf16.msra.mxu0 0
    %1090 = vmatprep.subr.bf16.mxu0 0
    %1091 = vmatpush1.bf16.msra.mxu0 0
    %1092 = vmatprep.subr.bf16.mxu0 0
    %1093 = vmatpush1.bf16.msra.mxu0 0
    %1094 = vmatprep.subr.bf16.mxu0 0
    %1095 = vmatpush1.bf16.msra.mxu0 0
    %1096 = vmatprep.subr.bf16.mxu0 0
    %1097 = vmatpush1.bf16.msra.mxu0 0
    %1098 = vmatprep.subr.bf16.mxu0 0
    %1099 = vmatpush1.bf16.msra.mxu0 %v1074
    %1100 = vmatprep.subr.bf16.mxu0 0
    %1101 = vmatpush1.bf16.msra.mxu0 %v1073
    %1102 = vmatprep.subr.bf16.mxu0 0
    %1103 = vmatpush2.bf16.msra.mxu0 0
    %1104 = vmatprep.subr.bf16.mxu0 0
    %1105 = vmatpush2.bf16.msra.mxu0 0
    %1106 = vmatprep.subr.bf16.mxu0 0
    %1107 = vmatpush2.bf16.msra.mxu0 0
    %1108 = vmatprep.subr.bf16.mxu0 0
    %1109 = vmatpush2.bf16.msra.mxu0 0
    %1110 = vmatprep.subr.bf16.mxu0 0
    %1111 = vmatpush2.bf16.msra.mxu0 0
    %1112 = vmatprep.subr.bf16.mxu0 0
    %1113 = vmatpush2.bf16.msra.mxu0 0
    %1114 = vmatprep.subr.bf16.mxu0 0
    %1115 = vmatpush2.bf16.msra.mxu0 0
    %1116 = vmatprep.subr.bf16.mxu0 0
    %1117 = vmatpush2.bf16.msra.mxu0 0
    %1118 = vmatprep.mubr.bf16.mxu0 0
    %1119 = vmatmul.mubr.bf16.gmra.mxu0 %v1078
    %v1120 = vpop.f32.mrf.mxu0
    %v1121 = vadd.f32 0.0, %v1120
    %v1122 = vpop.f32.mrf.mxu0
    %v1123 = vpop.f32.mrf.mxu0
    %v1124 = vadd.f32 0.0, %v1123
    %v1125 = vpop.f32.mrf.mxu0
    %1126 = vmatprep.mubr.bf16.mxu0 0
    %1127 = vmatmul.mubr.bf16.gmra.mxu0 %v1081
    %v1128 = vpop.f32.mrf.mxu0
    %v1129 = vadd.f32 0.0, %v1128
    %v1130 = vpop.f32.mrf.mxu0
    %v1131 = vpop.f32.mrf.mxu0
    %v1132 = vadd.f32 0.0, %v1131
    %v1133 = vpop.f32.mrf.mxu0
    %1134 = vmatprep.mubr.bf16.mxu0 0
    %1135 = vmatmul.mubr.bf16.gmra.mxu0 %v1084
    %v1136 = vpop.f32.mrf.mxu0
    %v1137 = vadd.f32 0.0, %v1136
    %v1138 = vpop.f32.mrf.mxu0
    %v1139 = vpop.f32.mrf.mxu0
    %v1140 = vadd.f32 0.0, %v1139
    %v1141 = vpop.f32.mrf.mxu0
    %1142 = vdwg.mxu0
    %v1143 = vadd.f32 %v1029, %v1121
    %v1144 = vadd.f32 %v1030, %v1124
    %v1145 = vadd.f32 %v1031, %v1129
    %v1146 = vadd.f32 %v1032, %v1132
    %v1147 = vadd.f32 %v1033, %v1137
    %v1148 = vadd.f32 %v1034, %v1140
    %v1149 = vld [vmem:[%s4 + $0x50] sm:$0xf]
    %v1150 = vld [vmem:[%s4 + $0x54] sm:$0xf]
    %v1151 = vld [vmem:[%s4 + $0x58] sm:$0xf]
    %v1152 = vld [vmem:[%s4 + $0x5c] sm:$0xf]
    %v1157 = vrot.slane %v944, 1
    %v1158 = vrot.slane %v945, 1
    %v1159 = vsel %vm852, %v1157, %v1158
    %v1160 = vrot.slane %v946, 1
    %v1161 = vsel %vm852, %v1158, %v1160
    %v1162 = vrot.slane %v1035, 1
    %v1163 = vsel %vm852, %v1160, %v1162
    %v1168 = vunpack.c.l.b16 %v1149
    %v1169 = vunpack.c.l.b16 %v1150
    %v1170 = vunpack.c.l.b16 %v1151
    %v1171 = vunpack.c.l.b16 %v1152
    %v1172 = vpack.c.b16 %v1169, %v1168
    %v1173 = vpack.c.b16 %v1171, %v1170
    %v1177 = vsel %vm702, %v1159, 0
    %v1180 = vsel %vm702, %v1161, 0
    %v1183 = vsel %vm702, %v1163, 0
    %1185 = vmatprep.subr.bf16.mxu0 0
    %1186 = vmatpush1.bf16.msra.mxu0 0
    %1187 = vmatprep.subr.bf16.mxu0 0
    %1188 = vmatpush1.bf16.msra.mxu0 0
    %1189 = vmatprep.subr.bf16.mxu0 0
    %1190 = vmatpush1.bf16.msra.mxu0 0
    %1191 = vmatprep.subr.bf16.mxu0 0
    %1192 = vmatpush1.bf16.msra.mxu0 0
    %1193 = vmatprep.subr.bf16.mxu0 0
    %1194 = vmatpush1.bf16.msra.mxu0 0
    %1195 = vmatprep.subr.bf16.mxu0 0
    %1196 = vmatpush1.bf16.msra.mxu0 0
    %1197 = vmatprep.subr.bf16.mxu0 0
    %1198 = vmatpush1.bf16.msra.mxu0 %v1173
    %1199 = vmatprep.subr.bf16.mxu0 0
    %1200 = vmatpush1.bf16.msra.mxu0 %v1172
    %1201 = vmatprep.subr.bf16.mxu0 0
    %1202 = vmatpush2.bf16.msra.mxu0 0
    %1203 = vmatprep.subr.bf16.mxu0 0
    %1204 = vmatpush2.bf16.msra.mxu0 0
    %1205 = vmatprep.subr.bf16.mxu0 0
    %1206 = vmatpush2.bf16.msra.mxu0 0
    %1207 = vmatprep.subr.bf16.mxu0 0
    %1208 = vmatpush2.bf16.msra.mxu0 0
    %1209 = vmatprep.subr.bf16.mxu0 0
    %1210 = vmatpush2.bf16.msra.mxu0 0
    %1211 = vmatprep.subr.bf16.mxu0 0
    %1212 = vmatpush2.bf16.msra.mxu0 0
    %1213 = vmatprep.subr.bf16.mxu0 0
    %1214 = vmatpush2.bf16.msra.mxu0 0
    %1215 = vmatprep.subr.bf16.mxu0 0
    %1216 = vmatpush2.bf16.msra.mxu0 0
    %1217 = vmatprep.mubr.bf16.mxu0 0
    %1218 = vmatmul.mubr.bf16.gmra.mxu0 %v1177
    %v1219 = vpop.f32.mrf.mxu0
    %v1220 = vadd.f32 0.0, %v1219
    %v1221 = vpop.f32.mrf.mxu0
    %v1222 = vpop.f32.mrf.mxu0
    %v1223 = vadd.f32 0.0, %v1222
    %v1224 = vpop.f32.mrf.mxu0
    %1225 = vmatprep.mubr.bf16.mxu0 0
    %1226 = vmatmul.mubr.bf16.gmra.mxu0 %v1180
    %v1227 = vpop.f32.mrf.mxu0
    %v1228 = vadd.f32 0.0, %v1227
    %v1229 = vpop.f32.mrf.mxu0
    %v1230 = vpop.f32.mrf.mxu0
    %v1231 = vadd.f32 0.0, %v1230
    %v1232 = vpop.f32.mrf.mxu0
    %1233 = vmatprep.mubr.bf16.mxu0 0
    %1234 = vmatmul.mubr.bf16.gmra.mxu0 %v1183
    %v1235 = vpop.f32.mrf.mxu0
    %v1236 = vadd.f32 0.0, %v1235
    %v1237 = vpop.f32.mrf.mxu0
    %v1238 = vpop.f32.mrf.mxu0
    %v1239 = vadd.f32 0.0, %v1238
    %v1240 = vpop.f32.mrf.mxu0
    %1241 = vdwg.mxu0
    %v1242 = vadd.f32 %v1143, %v1220
    %v1243 = vadd.f32 %v1144, %v1223
    %v1244 = vadd.f32 %v1145, %v1228
    %v1245 = vadd.f32 %v1146, %v1231
    %v1246 = vadd.f32 %v1147, %v1236
    %v1247 = vadd.f32 %v1148, %v1239
    %v1248 = vpack.c.bf16 %v647, %v646
    %v1249 = vld [vmem:[%s4 + $0x60] sm:$0xf]
    %v1250 = vld [vmem:[%s4 + $0x64] sm:$0xf]
    %v1251 = vld [vmem:[%s4 + $0x68] sm:$0xf]
    %v1252 = vld [vmem:[%s4 + $0x6c] sm:$0xf]
    %v1257 = vunpack.c.l.b16 %v1249
    %v1258 = vunpack.c.l.b16 %v1250
    %v1259 = vunpack.c.l.b16 %v1251
    %v1260 = vunpack.c.l.b16 %v1252
    %v1261 = vpack.c.b16 %v1258, %v1257
    %v1262 = vpack.c.b16 %v1260, %v1259
    %v1266 = vsel %vm702, %v1248, 0
    %1268 = vmatprep.subr.bf16.mxu0 0
    %1269 = vmatpush1.bf16.msra.mxu0 0
    %1270 = vmatprep.subr.bf16.mxu0 0
    %1271 = vmatpush1.bf16.msra.mxu0 0
    %1272 = vmatprep.subr.bf16.mxu0 0
    %1273 = vmatpush1.bf16.msra.mxu0 0
    %1274 = vmatprep.subr.bf16.mxu0 0
    %1275 = vmatpush1.bf16.msra.mxu0 0
    %1276 = vmatprep.subr.bf16.mxu0 0
    %1277 = vmatpush1.bf16.msra.mxu0 0
    %1278 = vmatprep.subr.bf16.mxu0 0
    %1279 = vmatpush1.bf16.msra.mxu0 0
    %1280 = vmatprep.subr.bf16.mxu0 0
    %1281 = vmatpush1.bf16.msra.mxu0 %v1262
    %1282 = vmatprep.subr.bf16.mxu0 0
    %1283 = vmatpush1.bf16.msra.mxu0 %v1261
    %1284 = vmatprep.subr.bf16.mxu0 0
    %1285 = vmatpush2.bf16.msra.mxu0 0
    %1286 = vmatprep.subr.bf16.mxu0 0
    %1287 = vmatpush2.bf16.msra.mxu0 0
    %1288 = vmatprep.subr.bf16.mxu0 0
    %1289 = vmatpush2.bf16.msra.mxu0 0
    %1290 = vmatprep.subr.bf16.mxu0 0
    %1291 = vmatpush2.bf16.msra.mxu0 0
    %1292 = vmatprep.subr.bf16.mxu0 0
    %1293 = vmatpush2.bf16.msra.mxu0 0
    %1294 = vmatprep.subr.bf16.mxu0 0
    %1295 = vmatpush2.bf16.msra.mxu0 0
    %1296 = vmatprep.subr.bf16.mxu0 0
    %1297 = vmatpush2.bf16.msra.mxu0 0
    %1298 = vmatprep.subr.bf16.mxu0 0
    %1299 = vmatpush2.bf16.msra.mxu0 0
    %1300 = vmatprep.mubr.bf16.mxu0 0
    %1301 = vmatmul.mubr.bf16.gmra.mxu0 %v783
    %v1302 = vpop.f32.mrf.mxu0
    %v1303 = vadd.f32 0.0, %v1302
    %v1304 = vpop.f32.mrf.mxu0
    %v1305 = vpop.f32.mrf.mxu0
    %v1306 = vadd.f32 0.0, %v1305
    %v1307 = vpop.f32.mrf.mxu0
    %1308 = vmatprep.mubr.bf16.mxu0 0
    %1309 = vmatmul.mubr.bf16.gmra.mxu0 %v785
    %v1310 = vpop.f32.mrf.mxu0
    %v1311 = vadd.f32 0.0, %v1310
    %v1312 = vpop.f32.mrf.mxu0
    %v1313 = vpop.f32.mrf.mxu0
    %v1314 = vadd.f32 0.0, %v1313
    %v1315 = vpop.f32.mrf.mxu0
    %1316 = vmatprep.mubr.bf16.mxu0 0
    %1317 = vmatmul.mubr.bf16.gmra.mxu0 %v1266
    %v1318 = vpop.f32.mrf.mxu0
    %v1319 = vadd.f32 0.0, %v1318
    %v1320 = vpop.f32.mrf.mxu0
    %v1321 = vpop.f32.mrf.mxu0
    %v1322 = vadd.f32 0.0, %v1321
    %v1323 = vpop.f32.mrf.mxu0
    %1324 = vdwg.mxu0
    %v1325 = vadd.f32 %v1242, %v1303
    %v1326 = vadd.f32 %v1243, %v1306
    %v1327 = vadd.f32 %v1244, %v1311
    %v1328 = vadd.f32 %v1245, %v1314
    %v1329 = vadd.f32 %v1246, %v1319
    %v1330 = vadd.f32 %v1247, %v1322
    %v1331 = vpack.c.bf16 %v648, %v648
    %v1332 = vld [vmem:[%s4 + $0x70] sm:$0xf]
    %v1333 = vld [vmem:[%s4 + $0x74] sm:$0xf]
    %v1334 = vld [vmem:[%s4 + $0x78] sm:$0xf]
    %v1335 = vld [vmem:[%s4 + $0x7c] sm:$0xf]
    %v1336 = vshll.u32 %v1248, 16
    %v1338 = vrot.slane %v1336, 1
    %v1339 = vsel %vm661, %v684, %v1338
    %v1340 = vshrl.u32 %v1248, 16
    %v1342 = vor.u32 %v1340, %v1338
    %v1344 = vshll.u32 %v1331, 16
    %v1346 = vrot.slane %v1344, 1
    %v1347 = vsel %vm661, %v1342, %v1346
    %v1352 = vunpack.c.l.b16 %v1332
    %v1353 = vunpack.c.l.b16 %v1333
    %v1354 = vunpack.c.l.b16 %v1334
    %v1355 = vunpack.c.l.b16 %v1335
    %v1356 = vpack.c.b16 %v1353, %v1352
    %v1357 = vpack.c.b16 %v1355, %v1354
    %v1361 = vsel %vm702, %v1339, 0
    %v1364 = vsel %vm702, %v1347, 0
    %1366 = vmatprep.subr.bf16.mxu0 0
    %1367 = vmatpush1.bf16.msra.mxu0 0
    %1368 = vmatprep.subr.bf16.mxu0 0
    %1369 = vmatpush1.bf16.msra.mxu0 0
    %1370 = vmatprep.subr.bf16.mxu0 0
    %1371 = vmatpush1.bf16.msra.mxu0 0
    %1372 = vmatprep.subr.bf16.mxu0 0
    %1373 = vmatpush1.bf16.msra.mxu0 0
    %1374 = vmatprep.subr.bf16.mxu0 0
    %1375 = vmatpush1.bf16.msra.mxu0 0
    %1376 = vmatprep.subr.bf16.mxu0 0
    %1377 = vmatpush1.bf16.msra.mxu0 0
    %1378 = vmatprep.subr.bf16.mxu0 0
    %1379 = vmatpush1.bf16.msra.mxu0 %v1357
    %1380 = vmatprep.subr.bf16.mxu0 0
    %1381 = vmatpush1.bf16.msra.mxu0 %v1356
    %1382 = vmatprep.subr.bf16.mxu0 0
    %1383 = vmatpush2.bf16.msra.mxu0 0
    %1384 = vmatprep.subr.bf16.mxu0 0
    %1385 = vmatpush2.bf16.msra.mxu0 0
    %1386 = vmatprep.subr.bf16.mxu0 0
    %1387 = vmatpush2.bf16.msra.mxu0 0
    %1388 = vmatprep.subr.bf16.mxu0 0
    %1389 = vmatpush2.bf16.msra.mxu0 0
    %1390 = vmatprep.subr.bf16.mxu0 0
    %1391 = vmatpush2.bf16.msra.mxu0 0
    %1392 = vmatprep.subr.bf16.mxu0 0
    %1393 = vmatpush2.bf16.msra.mxu0 0
    %1394 = vmatprep.subr.bf16.mxu0 0
    %1395 = vmatpush2.bf16.msra.mxu0 0
    %1396 = vmatprep.subr.bf16.mxu0 0
    %1397 = vmatpush2.bf16.msra.mxu0 0
    %1398 = vmatprep.mubr.bf16.mxu0 0
    %1399 = vmatmul.mubr.bf16.gmra.mxu0 %v707
    %v1400 = vpop.f32.mrf.mxu0
    %v1401 = vadd.f32 0.0, %v1400
    %v1402 = vpop.f32.mrf.mxu0
    %v1403 = vpop.f32.mrf.mxu0
    %v1404 = vadd.f32 0.0, %v1403
    %v1405 = vpop.f32.mrf.mxu0
    %1406 = vmatprep.mubr.bf16.mxu0 0
    %1407 = vmatmul.mubr.bf16.gmra.mxu0 %v1361
    %v1408 = vpop.f32.mrf.mxu0
    %v1409 = vadd.f32 0.0, %v1408
    %v1410 = vpop.f32.mrf.mxu0
    %v1411 = vpop.f32.mrf.mxu0
    %v1412 = vadd.f32 0.0, %v1411
    %v1413 = vpop.f32.mrf.mxu0
    %1414 = vmatprep.mubr.bf16.mxu0 0
    %1415 = vmatmul.mubr.bf16.gmra.mxu0 %v1364
    %v1416 = vpop.f32.mrf.mxu0
    %v1417 = vadd.f32 0.0, %v1416
    %v1418 = vpop.f32.mrf.mxu0
    %v1419 = vpop.f32.mrf.mxu0
    %v1420 = vadd.f32 0.0, %v1419
    %v1421 = vpop.f32.mrf.mxu0
    %1422 = vdwg.mxu0
    %v1423 = vadd.f32 %v1325, %v1401
    %v1424 = vadd.f32 %v1326, %v1404
    %v1425 = vadd.f32 %v1327, %v1409
    %v1426 = vadd.f32 %v1328, %v1412
    %v1427 = vadd.f32 %v1329, %v1417
    %v1428 = vadd.f32 %v1330, %v1420
    %v1429 = vld [vmem:[%s4 + $0x80] sm:$0xf]
    %v1430 = vld [vmem:[%s4 + $0x84] sm:$0xf]
    %v1431 = vld [vmem:[%s4 + $0x88] sm:$0xf]
    %v1432 = vld [vmem:[%s4 + $0x8c] sm:$0xf]
    %v1435 = vrot.slane %v1248, 1
    %v1436 = vsel %vm852, %v856, %v1435
    %v1437 = vrot.slane %v1331, 1
    %v1438 = vsel %vm852, %v1435, %v1437
    %v1443 = vunpack.c.l.b16 %v1429
    %v1444 = vunpack.c.l.b16 %v1430
    %v1445 = vunpack.c.l.b16 %v1431
    %v1446 = vunpack.c.l.b16 %v1432
    %v1447 = vpack.c.b16 %v1444, %v1443
    %v1448 = vpack.c.b16 %v1446, %v1445
    %v1452 = vsel %vm702, %v1436, 0
    %v1455 = vsel %vm702, %v1438, 0
    %1457 = vmatprep.subr.bf16.mxu0 0
    %1458 = vmatpush1.bf16.msra.mxu0 0
    %1459 = vmatprep.subr.bf16.mxu0 0
    %1460 = vmatpush1.bf16.msra.mxu0 0
    %1461 = vmatprep.subr.bf16.mxu0 0
    %1462 = vmatpush1.bf16.msra.mxu0 0
    %1463 = vmatprep.subr.bf16.mxu0 0
    %1464 = vmatpush1.bf16.msra.mxu0 0
    %1465 = vmatprep.subr.bf16.mxu0 0
    %1466 = vmatpush1.bf16.msra.mxu0 0
    %1467 = vmatprep.subr.bf16.mxu0 0
    %1468 = vmatpush1.bf16.msra.mxu0 0
    %1469 = vmatprep.subr.bf16.mxu0 0
    %1470 = vmatpush1.bf16.msra.mxu0 %v1448
    %1471 = vmatprep.subr.bf16.mxu0 0
    %1472 = vmatpush1.bf16.msra.mxu0 %v1447
    %1473 = vmatprep.subr.bf16.mxu0 0
    %1474 = vmatpush2.bf16.msra.mxu0 0
    %1475 = vmatprep.subr.bf16.mxu0 0
    %1476 = vmatpush2.bf16.msra.mxu0 0
    %1477 = vmatprep.subr.bf16.mxu0 0
    %1478 = vmatpush2.bf16.msra.mxu0 0
    %1479 = vmatprep.subr.bf16.mxu0 0
    %1480 = vmatpush2.bf16.msra.mxu0 0
    %1481 = vmatprep.subr.bf16.mxu0 0
    %1482 = vmatpush2.bf16.msra.mxu0 0
    %1483 = vmatprep.subr.bf16.mxu0 0
    %1484 = vmatpush2.bf16.msra.mxu0 0
    %1485 = vmatprep.subr.bf16.mxu0 0
    %1486 = vmatpush2.bf16.msra.mxu0 0
    %1487 = vmatprep.subr.bf16.mxu0 0
    %1488 = vmatpush2.bf16.msra.mxu0 0
    %1489 = vmatprep.mubr.bf16.mxu0 0
    %1490 = vmatmul.mubr.bf16.gmra.mxu0 %v876
    %v1491 = vpop.f32.mrf.mxu0
    %v1492 = vadd.f32 0.0, %v1491
    %v1493 = vpop.f32.mrf.mxu0
    %v1494 = vpop.f32.mrf.mxu0
    %v1495 = vadd.f32 0.0, %v1494
    %v1496 = vpop.f32.mrf.mxu0
    %1497 = vmatprep.mubr.bf16.mxu0 0
    %1498 = vmatmul.mubr.bf16.gmra.mxu0 %v1452
    %v1499 = vpop.f32.mrf.mxu0
    %v1500 = vadd.f32 0.0, %v1499
    %v1501 = vpop.f32.mrf.mxu0
    %v1502 = vpop.f32.mrf.mxu0
    %v1503 = vadd.f32 0.0, %v1502
    %v1504 = vpop.f32.mrf.mxu0
    %1505 = vmatprep.mubr.bf16.mxu0 0
    %1506 = vmatmul.mubr.bf16.gmra.mxu0 %v1455
    %v1507 = vpop.f32.mrf.mxu0
    %v1508 = vadd.f32 0.0, %v1507
    %v1509 = vpop.f32.mrf.mxu0
    %v1510 = vpop.f32.mrf.mxu0
    %v1511 = vadd.f32 0.0, %v1510
    %v1512 = vpop.f32.mrf.mxu0
    %1513 = vdwg.mxu0
    %v1514 = vadd.f32 %v1423, %v1492
    %v1515 = vadd.f32 %v1424, %v1495
    %v1516 = vadd.f32 %v1425, %v1500
    %v1517 = vadd.f32 %v1426, %v1503
    %v1518 = vadd.f32 %v1427, %v1508
    %v1519 = vadd.f32 %v1428, %v1511
    %v1520 = vlaneseq
    %v1521 = vshrl.u32 %v1520, 7
    %v1522 = vsub.s32 1, %v1521
    %v1523 = vrot.slane %v44, %v1522
    %v1524 = vadd.f32 %v1514, %v1523
    %v1525 = vadd.f32 %v1515, %v1523
    %v1526 = vadd.f32 %v1516, %v1523
    %v1527 = vadd.f32 %v1517, %v1523
    %v1528 = vadd.f32 %v1518, %v1523
    %v1529 = vadd.f32 %v1519, %v1523
    %v1530 = vmax.f32 %v1524, 0.0
    %v1531 = vmax.f32 %v1525, 0.0
    %v1532 = vmax.f32 %v1526, 0.0
    %v1533 = vmax.f32 %v1527, 0.0
    %v1534 = vmax.f32 %v1528, 0.0
    %v1535 = vmax.f32 %v1529, 0.0
    %v1536 = vmax.f32 %v1530, %v1531
    %v1537 = vmax.f32 %v1531, %v1532
    %v1538 = vmax.f32 %v1532, %v1533
    %v1539 = vmax.f32 %v1533, %v1534
    %v1540 = vmax.f32 %v1534, %v1535
    %vm1546 = vcmask 1046528
    %v1547 = vrot.slane %v1536, 1
    %v1548 = vrot.slane %v1537, 1
    %v1549 = vsel %vm1546, %v1547, %v1548
    %v1550 = vrot.slane %v1538, 1
    %v1551 = vrot.slane %v1539, 1
    %v1552 = vsel %vm1546, %v1550, %v1551
    %v1553 = vrot.slane %v1540, 1
    %v1557 = vmax.f32 %v1536, %v1549
    %v1558 = vmax.f32 %v1538, %v1552
    %v1559 = vmax.f32 %v1540, %v1553
    %v1560 = vpack.c.bf16 %v1557, %v1557
    %v1561 = vld [vmem:[%s5] sm:$0xf]
    %v1562 = vld [vmem:[%s5 + $0x4] sm:$0xf]
    %v1563 = vld [vmem:[%s5 + $0x8] sm:$0xf]
    %v1564 = vld [vmem:[%s5 + $0xc] sm:$0xf]
    %v1565 = vld [vmem:[%s5 + $0x10] sm:$0xf]
    %v1566 = vld [vmem:[%s5 + $0x14] sm:$0xf]
    %v1567 = vld [vmem:[%s5 + $0x18] sm:$0xf]
    %v1568 = vld [vmem:[%s5 + $0x1c] sm:$0xf]
    %v1569 = vld [vmem:[%s5 + $0x20] sm:$0xf]
    %v1570 = vld [vmem:[%s5 + $0x24] sm:$0xf]
    %v1571 = vld [vmem:[%s5 + $0x28] sm:$0xf]
    %v1572 = vld [vmem:[%s5 + $0x2c] sm:$0xf]
    %v1573 = vld [vmem:[%s5 + $0x30] sm:$0xf]
    %v1574 = vld [vmem:[%s5 + $0x34] sm:$0xf]
    %v1575 = vld [vmem:[%s5 + $0x38] sm:$0xf]
    %v1576 = vld [vmem:[%s5 + $0x3c] sm:$0xf]
    %v1578 = vrot.slane %v1560, 1
    %v1587 = vunpack.c.l.b16 %v1569
    %v1588 = vunpack.c.l.b16 %v1570
    %v1589 = vunpack.c.l.b16 %v1571
    %v1590 = vunpack.c.l.b16 %v1572
    %v1591 = vunpack.c.l.b16 %v1573
    %v1592 = vunpack.c.l.b16 %v1574
    %v1593 = vunpack.c.l.b16 %v1575
    %v1594 = vunpack.c.l.b16 %v1576
    %v1595 = vpack.c.b16 %v1588, %v1587
    %v1596 = vpack.c.b16 %v1590, %v1589
    %v1597 = vpack.c.b16 %v1592, %v1591
    %v1598 = vpack.c.b16 %v1594, %v1593
    %vm1603 = vcmask 523264
    %v1605 = vsel %vm1603, %v1578, 0
    %1607 = vmatprep.subr.bf16.mxu0 0
    %1608 = vmatpush1.bf16.msra.mxu0 0
    %1609 = vmatprep.subr.bf16.mxu0 0
    %1610 = vmatpush1.bf16.msra.mxu0 0
    %1611 = vmatprep.subr.bf16.mxu0 0
    %1612 = vmatpush1.bf16.msra.mxu0 0
    %1613 = vmatprep.subr.bf16.mxu0 0
    %1614 = vmatpush1.bf16.msra.mxu0 0
    %1615 = vmatprep.subr.bf16.mxu0 0
    %1616 = vmatpush1.bf16.msra.mxu0 %v1598
    %1617 = vmatprep.subr.bf16.mxu0 0
    %1618 = vmatpush1.bf16.msra.mxu0 %v1597
    %1619 = vmatprep.subr.bf16.mxu0 0
    %1620 = vmatpush1.bf16.msra.mxu0 %v1596
    %1621 = vmatprep.subr.bf16.mxu0 0
    %1622 = vmatpush1.bf16.msra.mxu0 %v1595
    %1623 = vmatprep.subr.bf16.mxu0 0
    %1624 = vmatpush2.bf16.msra.mxu0 0
    %1625 = vmatprep.subr.bf16.mxu0 0
    %1626 = vmatpush2.bf16.msra.mxu0 0
    %1627 = vmatprep.subr.bf16.mxu0 0
    %1628 = vmatpush2.bf16.msra.mxu0 0
    %1629 = vmatprep.subr.bf16.mxu0 0
    %1630 = vmatpush2.bf16.msra.mxu0 0
    %1631 = vmatprep.subr.bf16.mxu0 0
    %1632 = vmatpush2.bf16.msra.mxu0 0
    %1633 = vmatprep.subr.bf16.mxu0 0
    %1634 = vmatpush2.bf16.msra.mxu0 0
    %1635 = vmatprep.subr.bf16.mxu0 0
    %1636 = vmatpush2.bf16.msra.mxu0 0
    %1637 = vmatprep.subr.bf16.mxu0 0
    %1638 = vmatpush2.bf16.msra.mxu0 0
    %1639 = vmatprep.mubr.bf16.mxu0 0
    %1640 = vmatmul.mubr.bf16.gmra.mxu0 %v1605
    %v1641 = vpop.f32.mrf.mxu0
    %v1642 = vadd.f32 0.0, %v1641
    %v1643 = vpop.f32.mrf.mxu0
    %v1644 = vpop.f32.mrf.mxu0
    %v1645 = vpop.f32.mrf.mxu0
    %1646 = vdwg.mxu0
    %v1655 = vunpack.c.l.b16 %v1561
    %v1656 = vunpack.c.l.b16 %v1562
    %v1657 = vunpack.c.l.b16 %v1563
    %v1658 = vunpack.c.l.b16 %v1564
    %v1659 = vunpack.c.l.b16 %v1565
    %v1660 = vunpack.c.l.b16 %v1566
    %v1661 = vunpack.c.l.b16 %v1567
    %v1662 = vunpack.c.l.b16 %v1568
    %v1663 = vpack.c.b16 %v1656, %v1655
    %v1664 = vpack.c.b16 %v1658, %v1657
    %v1665 = vpack.c.b16 %v1660, %v1659
    %v1666 = vpack.c.b16 %v1662, %v1661
    %v1672 = vsel %vm1603, %v1560, 0
    %1674 = vmatprep.subr.bf16.mxu0 0
    %1675 = vmatpush1.bf16.msra.mxu0 0
    %1676 = vmatprep.subr.bf16.mxu0 0
    %1677 = vmatpush1.bf16.msra.mxu0 0
    %1678 = vmatprep.subr.bf16.mxu0 0
    %1679 = vmatpush1.bf16.msra.mxu0 0
    %1680 = vmatprep.subr.bf16.mxu0 0
    %1681 = vmatpush1.bf16.msra.mxu0 0
    %1682 = vmatprep.subr.bf16.mxu0 0
    %1683 = vmatpush1.bf16.msra.mxu0 %v1666
    %1684 = vmatprep.subr.bf16.mxu0 0
    %1685 = vmatpush1.bf16.msra.mxu0 %v1665
    %1686 = vmatprep.subr.bf16.mxu0 0
    %1687 = vmatpush1.bf16.msra.mxu0 %v1664
    %1688 = vmatprep.subr.bf16.mxu0 0
    %1689 = vmatpush1.bf16.msra.mxu0 %v1663
    %1690 = vmatprep.subr.bf16.mxu0 0
    %1691 = vmatpush2.bf16.msra.mxu0 0
    %1692 = vmatprep.subr.bf16.mxu0 0
    %1693 = vmatpush2.bf16.msra.mxu0 0
    %1694 = vmatprep.subr.bf16.mxu0 0
    %1695 = vmatpush2.bf16.msra.mxu0 0
    %1696 = vmatprep.subr.bf16.mxu0 0
    %1697 = vmatpush2.bf16.msra.mxu0 0
    %1698 = vmatprep.subr.bf16.mxu0 0
    %1699 = vmatpush2.bf16.msra.mxu0 0
    %1700 = vmatprep.subr.bf16.mxu0 0
    %1701 = vmatpush2.bf16.msra.mxu0 0
    %1702 = vmatprep.subr.bf16.mxu0 0
    %1703 = vmatpush2.bf16.msra.mxu0 0
    %1704 = vmatprep.subr.bf16.mxu0 0
    %1705 = vmatpush2.bf16.msra.mxu0 0
    %1706 = vmatprep.mubr.bf16.mxu0 0
    %1707 = vmatmul.mubr.bf16.gmra.mxu0 %v1672
    %v1708 = vpop.f32.mrf.mxu0
    %v1709 = vadd.f32 %v1642, %v1708
    %v1710 = vpop.f32.mrf.mxu0
    %v1711 = vpop.f32.mrf.mxu0
    %v1712 = vpop.f32.mrf.mxu0
    %1713 = vdwg.mxu0
    %v1714 = vld [vmem:[%s5 + $0x40] sm:$0xf]
    %v1715 = vld [vmem:[%s5 + $0x44] sm:$0xf]
    %v1716 = vld [vmem:[%s5 + $0x48] sm:$0xf]
    %v1717 = vld [vmem:[%s5 + $0x4c] sm:$0xf]
    %v1718 = vld [vmem:[%s5 + $0x50] sm:$0xf]
    %v1719 = vld [vmem:[%s5 + $0x54] sm:$0xf]
    %v1720 = vld [vmem:[%s5 + $0x58] sm:$0xf]
    %v1721 = vld [vmem:[%s5 + $0x5c] sm:$0xf]
    %v1722 = vrot.slane %v1560, 2
    %v1731 = vunpack.c.l.b16 %v1714
    %v1732 = vunpack.c.l.b16 %v1715
    %v1733 = vunpack.c.l.b16 %v1716
    %v1734 = vunpack.c.l.b16 %v1717
    %v1735 = vunpack.c.l.b16 %v1718
    %v1736 = vunpack.c.l.b16 %v1719
    %v1737 = vunpack.c.l.b16 %v1720
    %v1738 = vunpack.c.l.b16 %v1721
    %v1739 = vpack.c.b16 %v1732, %v1731
    %v1740 = vpack.c.b16 %v1734, %v1733
    %v1741 = vpack.c.b16 %v1736, %v1735
    %v1742 = vpack.c.b16 %v1738, %v1737
    %v1748 = vsel %vm1603, %v1722, 0
    %1750 = vmatprep.subr.bf16.mxu0 0
    %1751 = vmatpush1.bf16.msra.mxu0 0
    %1752 = vmatprep.subr.bf16.mxu0 0
    %1753 = vmatpush1.bf16.msra.mxu0 0
    %1754 = vmatprep.subr.bf16.mxu0 0
    %1755 = vmatpush1.bf16.msra.mxu0 0
    %1756 = vmatprep.subr.bf16.mxu0 0
    %1757 = vmatpush1.bf16.msra.mxu0 0
    %1758 = vmatprep.subr.bf16.mxu0 0
    %1759 = vmatpush1.bf16.msra.mxu0 %v1742
    %1760 = vmatprep.subr.bf16.mxu0 0
    %1761 = vmatpush1.bf16.msra.mxu0 %v1741
    %1762 = vmatprep.subr.bf16.mxu0 0
    %1763 = vmatpush1.bf16.msra.mxu0 %v1740
    %1764 = vmatprep.subr.bf16.mxu0 0
    %1765 = vmatpush1.bf16.msra.mxu0 %v1739
    %1766 = vmatprep.subr.bf16.mxu0 0
    %1767 = vmatpush2.bf16.msra.mxu0 0
    %1768 = vmatprep.subr.bf16.mxu0 0
    %1769 = vmatpush2.bf16.msra.mxu0 0
    %1770 = vmatprep.subr.bf16.mxu0 0
    %1771 = vmatpush2.bf16.msra.mxu0 0
    %1772 = vmatprep.subr.bf16.mxu0 0
    %1773 = vmatpush2.bf16.msra.mxu0 0
    %1774 = vmatprep.subr.bf16.mxu0 0
    %1775 = vmatpush2.bf16.msra.mxu0 0
    %1776 = vmatprep.subr.bf16.mxu0 0
    %1777 = vmatpush2.bf16.msra.mxu0 0
    %1778 = vmatprep.subr.bf16.mxu0 0
    %1779 = vmatpush2.bf16.msra.mxu0 0
    %1780 = vmatprep.subr.bf16.mxu0 0
    %1781 = vmatpush2.bf16.msra.mxu0 0
    %1782 = vmatprep.mubr.bf16.mxu0 0
    %1783 = vmatmul.mubr.bf16.gmra.mxu0 %v1748
    %v1784 = vpop.f32.mrf.mxu0
    %v1785 = vadd.f32 0.0, %v1784
    %v1786 = vpop.f32.mrf.mxu0
    %v1787 = vpop.f32.mrf.mxu0
    %v1788 = vpop.f32.mrf.mxu0
    %1789 = vdwg.mxu0
    %v1790 = vadd.f32 %v1709, %v1785
    %v1791 = vpack.c.bf16 %v1558, %v1558
    %v1792 = vld [vmem:[%s5 + $0x60] sm:$0xf]
    %v1793 = vld [vmem:[%s5 + $0x64] sm:$0xf]
    %v1794 = vld [vmem:[%s5 + $0x68] sm:$0xf]
    %v1795 = vld [vmem:[%s5 + $0x6c] sm:$0xf]
    %v1796 = vld [vmem:[%s5 + $0x70] sm:$0xf]
    %v1797 = vld [vmem:[%s5 + $0x74] sm:$0xf]
    %v1798 = vld [vmem:[%s5 + $0x78] sm:$0xf]
    %v1799 = vld [vmem:[%s5 + $0x7c] sm:$0xf]
    %v1808 = vunpack.c.l.b16 %v1792
    %v1809 = vunpack.c.l.b16 %v1793
    %v1810 = vunpack.c.l.b16 %v1794
    %v1811 = vunpack.c.l.b16 %v1795
    %v1812 = vunpack.c.l.b16 %v1796
    %v1813 = vunpack.c.l.b16 %v1797
    %v1814 = vunpack.c.l.b16 %v1798
    %v1815 = vunpack.c.l.b16 %v1799
    %v1816 = vpack.c.b16 %v1809, %v1808
    %v1817 = vpack.c.b16 %v1811, %v1810
    %v1818 = vpack.c.b16 %v1813, %v1812
    %v1819 = vpack.c.b16 %v1815, %v1814
    %v1825 = vsel %vm1603, %v1791, 0
    %1827 = vmatprep.subr.bf16.mxu0 0
    %1828 = vmatpush1.bf16.msra.mxu0 0
    %1829 = vmatprep.subr.bf16.mxu0 0
    %1830 = vmatpush1.bf16.msra.mxu0 0
    %1831 = vmatprep.subr.bf16.mxu0 0
    %1832 = vmatpush1.bf16.msra.mxu0 0
    %1833 = vmatprep.subr.bf16.mxu0 0
    %1834 = vmatpush1.bf16.msra.mxu0 0
    %1835 = vmatprep.subr.bf16.mxu0 0
    %1836 = vmatpush1.bf16.msra.mxu0 %v1819
    %1837 = vmatprep.subr.bf16.mxu0 0
    %1838 = vmatpush1.bf16.msra.mxu0 %v1818
    %1839 = vmatprep.subr.bf16.mxu0 0
    %1840 = vmatpush1.bf16.msra.mxu0 %v1817
    %1841 = vmatprep.subr.bf16.mxu0 0
    %1842 = vmatpush1.bf16.msra.mxu0 %v1816
    %1843 = vmatprep.subr.bf16.mxu0 0
    %1844 = vmatpush2.bf16.msra.mxu0 0
    %1845 = vmatprep.subr.bf16.mxu0 0
    %1846 = vmatpush2.bf16.msra.mxu0 0
    %1847 = vmatprep.subr.bf16.mxu0 0
    %1848 = vmatpush2.bf16.msra.mxu0 0
    %1849 = vmatprep.subr.bf16.mxu0 0
    %1850 = vmatpush2.bf16.msra.mxu0 0
    %1851 = vmatprep.subr.bf16.mxu0 0
    %1852 = vmatpush2.bf16.msra.mxu0 0
    %1853 = vmatprep.subr.bf16.mxu0 0
    %1854 = vmatpush2.bf16.msra.mxu0 0
    %1855 = vmatprep.subr.bf16.mxu0 0
    %1856 = vmatpush2.bf16.msra.mxu0 0
    %1857 = vmatprep.subr.bf16.mxu0 0
    %1858 = vmatpush2.bf16.msra.mxu0 0
    %1859 = vmatprep.mubr.bf16.mxu0 0
    %1860 = vmatmul.mubr.bf16.gmra.mxu0 %v1825
    %v1861 = vpop.f32.mrf.mxu0
    %v1862 = vadd.f32 0.0, %v1861
    %v1863 = vpop.f32.mrf.mxu0
    %v1864 = vpop.f32.mrf.mxu0
    %v1865 = vpop.f32.mrf.mxu0
    %1866 = vdwg.mxu0
    %v1867 = vadd.f32 %v1790, %v1862
    %v1868 = vld [vmem:[%s5 + $0x80] sm:$0xf]
    %v1869 = vld [vmem:[%s5 + $0x84] sm:$0xf]
    %v1870 = vld [vmem:[%s5 + $0x88] sm:$0xf]
    %v1871 = vld [vmem:[%s5 + $0x8c] sm:$0xf]
    %v1872 = vld [vmem:[%s5 + $0x90] sm:$0xf]
    %v1873 = vld [vmem:[%s5 + $0x94] sm:$0xf]
    %v1874 = vld [vmem:[%s5 + $0x98] sm:$0xf]
    %v1875 = vld [vmem:[%s5 + $0x9c] sm:$0xf]
    %v1877 = vrot.slane %v1791, 1
    %v1886 = vunpack.c.l.b16 %v1868
    %v1887 = vunpack.c.l.b16 %v1869
    %v1888 = vunpack.c.l.b16 %v1870
    %v1889 = vunpack.c.l.b16 %v1871
    %v1890 = vunpack.c.l.b16 %v1872
    %v1891 = vunpack.c.l.b16 %v1873
    %v1892 = vunpack.c.l.b16 %v1874
    %v1893 = vunpack.c.l.b16 %v1875
    %v1894 = vpack.c.b16 %v1887, %v1886
    %v1895 = vpack.c.b16 %v1889, %v1888
    %v1896 = vpack.c.b16 %v1891, %v1890
    %v1897 = vpack.c.b16 %v1893, %v1892
    %v1903 = vsel %vm1603, %v1877, 0
    %1905 = vmatprep.subr.bf16.mxu0 0
    %1906 = vmatpush1.bf16.msra.mxu0 0
    %1907 = vmatprep.subr.bf16.mxu0 0
    %1908 = vmatpush1.bf16.msra.mxu0 0
    %1909 = vmatprep.subr.bf16.mxu0 0
    %1910 = vmatpush1.bf16.msra.mxu0 0
    %1911 = vmatprep.subr.bf16.mxu0 0
    %1912 = vmatpush1.bf16.msra.mxu0 0
    %1913 = vmatprep.subr.bf16.mxu0 0
    %1914 = vmatpush1.bf16.msra.mxu0 %v1897
    %1915 = vmatprep.subr.bf16.mxu0 0
    %1916 = vmatpush1.bf16.msra.mxu0 %v1896
    %1917 = vmatprep.subr.bf16.mxu0 0
    %1918 = vmatpush1.bf16.msra.mxu0 %v1895
    %1919 = vmatprep.subr.bf16.mxu0 0
    %1920 = vmatpush1.bf16.msra.mxu0 %v1894
    %1921 = vmatprep.subr.bf16.mxu0 0
    %1922 = vmatpush2.bf16.msra.mxu0 0
    %1923 = vmatprep.subr.bf16.mxu0 0
    %1924 = vmatpush2.bf16.msra.mxu0 0
    %1925 = vmatprep.subr.bf16.mxu0 0
    %1926 = vmatpush2.bf16.msra.mxu0 0
    %1927 = vmatprep.subr.bf16.mxu0 0
    %1928 = vmatpush2.bf16.msra.mxu0 0
    %1929 = vmatprep.subr.bf16.mxu0 0
    %1930 = vmatpush2.bf16.msra.mxu0 0
    %1931 = vmatprep.subr.bf16.mxu0 0
    %1932 = vmatpush2.bf16.msra.mxu0 0
    %1933 = vmatprep.subr.bf16.mxu0 0
    %1934 = vmatpush2.bf16.msra.mxu0 0
    %1935 = vmatprep.subr.bf16.mxu0 0
    %1936 = vmatpush2.bf16.msra.mxu0 0
    %1937 = vmatprep.mubr.bf16.mxu0 0
    %1938 = vmatmul.mubr.bf16.gmra.mxu0 %v1903
    %v1939 = vpop.f32.mrf.mxu0
    %v1940 = vadd.f32 0.0, %v1939
    %v1941 = vpop.f32.mrf.mxu0
    %v1942 = vpop.f32.mrf.mxu0
    %v1943 = vpop.f32.mrf.mxu0
    %1944 = vdwg.mxu0
    %v1945 = vadd.f32 %v1867, %v1940
    %v1946 = vld [vmem:[%s5 + $0xa0] sm:$0xf]
    %v1947 = vld [vmem:[%s5 + $0xa4] sm:$0xf]
    %v1948 = vld [vmem:[%s5 + $0xa8] sm:$0xf]
    %v1949 = vld [vmem:[%s5 + $0xac] sm:$0xf]
    %v1950 = vld [vmem:[%s5 + $0xb0] sm:$0xf]
    %v1951 = vld [vmem:[%s5 + $0xb4] sm:$0xf]
    %v1952 = vld [vmem:[%s5 + $0xb8] sm:$0xf]
    %v1953 = vld [vmem:[%s5 + $0xbc] sm:$0xf]
    %v1954 = vrot.slane %v1791, 2
    %v1963 = vunpack.c.l.b16 %v1946
    %v1964 = vunpack.c.l.b16 %v1947
    %v1965 = vunpack.c.l.b16 %v1948
    %v1966 = vunpack.c.l.b16 %v1949
    %v1967 = vunpack.c.l.b16 %v1950
    %v1968 = vunpack.c.l.b16 %v1951
    %v1969 = vunpack.c.l.b16 %v1952
    %v1970 = vunpack.c.l.b16 %v1953
    %v1971 = vpack.c.b16 %v1964, %v1963
    %v1972 = vpack.c.b16 %v1966, %v1965
    %v1973 = vpack.c.b16 %v1968, %v1967
    %v1974 = vpack.c.b16 %v1970, %v1969
    %v1980 = vsel %vm1603, %v1954, 0
    %1982 = vmatprep.subr.bf16.mxu0 0
    %1983 = vmatpush1.bf16.msra.mxu0 0
    %1984 = vmatprep.subr.bf16.mxu0 0
    %1985 = vmatpush1.bf16.msra.mxu0 0
    %1986 = vmatprep.subr.bf16.mxu0 0
    %1987 = vmatpush1.bf16.msra.mxu0 0
    %1988 = vmatprep.subr.bf16.mxu0 0
    %1989 = vmatpush1.bf16.msra.mxu0 0
    %1990 = vmatprep.subr.bf16.mxu0 0
    %1991 = vmatpush1.bf16.msra.mxu0 %v1974
    %1992 = vmatprep.subr.bf16.mxu0 0
    %1993 = vmatpush1.bf16.msra.mxu0 %v1973
    %1994 = vmatprep.subr.bf16.mxu0 0
    %1995 = vmatpush1.bf16.msra.mxu0 %v1972
    %1996 = vmatprep.subr.bf16.mxu0 0
    %1997 = vmatpush1.bf16.msra.mxu0 %v1971
    %1998 = vmatprep.subr.bf16.mxu0 0
    %1999 = vmatpush2.bf16.msra.mxu0 0
    %2000 = vmatprep.subr.bf16.mxu0 0
    %2001 = vmatpush2.bf16.msra.mxu0 0
    %2002 = vmatprep.subr.bf16.mxu0 0
    %2003 = vmatpush2.bf16.msra.mxu0 0
    %2004 = vmatprep.subr.bf16.mxu0 0
    %2005 = vmatpush2.bf16.msra.mxu0 0
    %2006 = vmatprep.subr.bf16.mxu0 0
    %2007 = vmatpush2.bf16.msra.mxu0 0
    %2008 = vmatprep.subr.bf16.mxu0 0
    %2009 = vmatpush2.bf16.msra.mxu0 0
    %2010 = vmatprep.subr.bf16.mxu0 0
    %2011 = vmatpush2.bf16.msra.mxu0 0
    %2012 = vmatprep.subr.bf16.mxu0 0
    %2013 = vmatpush2.bf16.msra.mxu0 0
    %2014 = vmatprep.mubr.bf16.mxu0 0
    %2015 = vmatmul.mubr.bf16.gmra.mxu0 %v1980
    %v2016 = vpop.f32.mrf.mxu0
    %v2017 = vadd.f32 0.0, %v2016
    %v2018 = vpop.f32.mrf.mxu0
    %v2019 = vpop.f32.mrf.mxu0
    %v2020 = vpop.f32.mrf.mxu0
    %2021 = vdwg.mxu0
    %v2022 = vadd.f32 %v1945, %v2017
    %v2023 = vpack.c.bf16 %v1559, %v1559
    %v2024 = vld [vmem:[%s5 + $0xc0] sm:$0xf]
    %v2025 = vld [vmem:[%s5 + $0xc4] sm:$0xf]
    %v2026 = vld [vmem:[%s5 + $0xc8] sm:$0xf]
    %v2027 = vld [vmem:[%s5 + $0xcc] sm:$0xf]
    %v2028 = vld [vmem:[%s5 + $0xd0] sm:$0xf]
    %v2029 = vld [vmem:[%s5 + $0xd4] sm:$0xf]
    %v2030 = vld [vmem:[%s5 + $0xd8] sm:$0xf]
    %v2031 = vld [vmem:[%s5 + $0xdc] sm:$0xf]
    %v2040 = vunpack.c.l.b16 %v2024
    %v2041 = vunpack.c.l.b16 %v2025
    %v2042 = vunpack.c.l.b16 %v2026
    %v2043 = vunpack.c.l.b16 %v2027
    %v2044 = vunpack.c.l.b16 %v2028
    %v2045 = vunpack.c.l.b16 %v2029
    %v2046 = vunpack.c.l.b16 %v2030
    %v2047 = vunpack.c.l.b16 %v2031
    %v2048 = vpack.c.b16 %v2041, %v2040
    %v2049 = vpack.c.b16 %v2043, %v2042
    %v2050 = vpack.c.b16 %v2045, %v2044
    %v2051 = vpack.c.b16 %v2047, %v2046
    %v2057 = vsel %vm1603, %v2023, 0
    %2059 = vmatprep.subr.bf16.mxu0 0
    %2060 = vmatpush1.bf16.msra.mxu0 0
    %2061 = vmatprep.subr.bf16.mxu0 0
    %2062 = vmatpush1.bf16.msra.mxu0 0
    %2063 = vmatprep.subr.bf16.mxu0 0
    %2064 = vmatpush1.bf16.msra.mxu0 0
    %2065 = vmatprep.subr.bf16.mxu0 0
    %2066 = vmatpush1.bf16.msra.mxu0 0
    %2067 = vmatprep.subr.bf16.mxu0 0
    %2068 = vmatpush1.bf16.msra.mxu0 %v2051
    %2069 = vmatprep.subr.bf16.mxu0 0
    %2070 = vmatpush1.bf16.msra.mxu0 %v2050
    %2071 = vmatprep.subr.bf16.mxu0 0
    %2072 = vmatpush1.bf16.msra.mxu0 %v2049
    %2073 = vmatprep.subr.bf16.mxu0 0
    %2074 = vmatpush1.bf16.msra.mxu0 %v2048
    %2075 = vmatprep.subr.bf16.mxu0 0
    %2076 = vmatpush2.bf16.msra.mxu0 0
    %2077 = vmatprep.subr.bf16.mxu0 0
    %2078 = vmatpush2.bf16.msra.mxu0 0
    %2079 = vmatprep.subr.bf16.mxu0 0
    %2080 = vmatpush2.bf16.msra.mxu0 0
    %2081 = vmatprep.subr.bf16.mxu0 0
    %2082 = vmatpush2.bf16.msra.mxu0 0
    %2083 = vmatprep.subr.bf16.mxu0 0
    %2084 = vmatpush2.bf16.msra.mxu0 0
    %2085 = vmatprep.subr.bf16.mxu0 0
    %2086 = vmatpush2.bf16.msra.mxu0 0
    %2087 = vmatprep.subr.bf16.mxu0 0
    %2088 = vmatpush2.bf16.msra.mxu0 0
    %2089 = vmatprep.subr.bf16.mxu0 0
    %2090 = vmatpush2.bf16.msra.mxu0 0
    %2091 = vmatprep.mubr.bf16.mxu0 0
    %2092 = vmatmul.mubr.bf16.gmra.mxu0 %v2057
    %v2093 = vpop.f32.mrf.mxu0
    %v2094 = vadd.f32 0.0, %v2093
    %v2095 = vpop.f32.mrf.mxu0
    %v2096 = vpop.f32.mrf.mxu0
    %v2097 = vpop.f32.mrf.mxu0
    %2098 = vdwg.mxu0
    %v2099 = vadd.f32 %v2022, %v2094
    %v2100 = vld [vmem:[%s5 + $0xe0] sm:$0xf]
    %v2101 = vld [vmem:[%s5 + $0xe4] sm:$0xf]
    %v2102 = vld [vmem:[%s5 + $0xe8] sm:$0xf]
    %v2103 = vld [vmem:[%s5 + $0xec] sm:$0xf]
    %v2104 = vld [vmem:[%s5 + $0xf0] sm:$0xf]
    %v2105 = vld [vmem:[%s5 + $0xf4] sm:$0xf]
    %v2106 = vld [vmem:[%s5 + $0xf8] sm:$0xf]
    %v2107 = vld [vmem:[%s5 + $0xfc] sm:$0xf]
    %v2109 = vrot.slane %v2023, 1
    %v2118 = vunpack.c.l.b16 %v2100
    %v2119 = vunpack.c.l.b16 %v2101
    %v2120 = vunpack.c.l.b16 %v2102
    %v2121 = vunpack.c.l.b16 %v2103
    %v2122 = vunpack.c.l.b16 %v2104
    %v2123 = vunpack.c.l.b16 %v2105
    %v2124 = vunpack.c.l.b16 %v2106
    %v2125 = vunpack.c.l.b16 %v2107
    %v2126 = vpack.c.b16 %v2119, %v2118
    %v2127 = vpack.c.b16 %v2121, %v2120
    %v2128 = vpack.c.b16 %v2123, %v2122
    %v2129 = vpack.c.b16 %v2125, %v2124
    %v2135 = vsel %vm1603, %v2109, 0
    %2137 = vmatprep.subr.bf16.mxu0 0
    %2138 = vmatpush1.bf16.msra.mxu0 0
    %2139 = vmatprep.subr.bf16.mxu0 0
    %2140 = vmatpush1.bf16.msra.mxu0 0
    %2141 = vmatprep.subr.bf16.mxu0 0
    %2142 = vmatpush1.bf16.msra.mxu0 0
    %2143 = vmatprep.subr.bf16.mxu0 0
    %2144 = vmatpush1.bf16.msra.mxu0 0
    %2145 = vmatprep.subr.bf16.mxu0 0
    %2146 = vmatpush1.bf16.msra.mxu0 %v2129
    %2147 = vmatprep.subr.bf16.mxu0 0
    %2148 = vmatpush1.bf16.msra.mxu0 %v2128
    %2149 = vmatprep.subr.bf16.mxu0 0
    %2150 = vmatpush1.bf16.msra.mxu0 %v2127
    %2151 = vmatprep.subr.bf16.mxu0 0
    %2152 = vmatpush1.bf16.msra.mxu0 %v2126
    %2153 = vmatprep.subr.bf16.mxu0 0
    %2154 = vmatpush2.bf16.msra.mxu0 0
    %2155 = vmatprep.subr.bf16.mxu0 0
    %2156 = vmatpush2.bf16.msra.mxu0 0
    %2157 = vmatprep.subr.bf16.mxu0 0
    %2158 = vmatpush2.bf16.msra.mxu0 0
    %2159 = vmatprep.subr.bf16.mxu0 0
    %2160 = vmatpush2.bf16.msra.mxu0 0
    %2161 = vmatprep.subr.bf16.mxu0 0
    %2162 = vmatpush2.bf16.msra.mxu0 0
    %2163 = vmatprep.subr.bf16.mxu0 0
    %2164 = vmatpush2.bf16.msra.mxu0 0
    %2165 = vmatprep.subr.bf16.mxu0 0
    %2166 = vmatpush2.bf16.msra.mxu0 0
    %2167 = vmatprep.subr.bf16.mxu0 0
    %2168 = vmatpush2.bf16.msra.mxu0 0
    %2169 = vmatprep.mubr.bf16.mxu0 0
    %2170 = vmatmul.mubr.bf16.gmra.mxu0 %v2135
    %v2171 = vpop.f32.mrf.mxu0
    %v2172 = vadd.f32 0.0, %v2171
    %v2173 = vpop.f32.mrf.mxu0
    %v2174 = vpop.f32.mrf.mxu0
    %v2175 = vpop.f32.mrf.mxu0
    %2176 = vdwg.mxu0
    %v2177 = vadd.f32 %v2099, %v2172
    %v2178 = vld [vmem:[%s5 + $0x100] sm:$0xf]
    %v2179 = vld [vmem:[%s5 + $0x104] sm:$0xf]
    %v2180 = vld [vmem:[%s5 + $0x108] sm:$0xf]
    %v2181 = vld [vmem:[%s5 + $0x10c] sm:$0xf]
    %v2182 = vld [vmem:[%s5 + $0x110] sm:$0xf]
    %v2183 = vld [vmem:[%s5 + $0x114] sm:$0xf]
    %v2184 = vld [vmem:[%s5 + $0x118] sm:$0xf]
    %v2185 = vld [vmem:[%s5 + $0x11c] sm:$0xf]
    %v2186 = vrot.slane %v2023, 2
    %v2195 = vunpack.c.l.b16 %v2178
    %v2196 = vunpack.c.l.b16 %v2179
    %v2197 = vunpack.c.l.b16 %v2180
    %v2198 = vunpack.c.l.b16 %v2181
    %v2199 = vunpack.c.l.b16 %v2182
    %v2200 = vunpack.c.l.b16 %v2183
    %v2201 = vunpack.c.l.b16 %v2184
    %v2202 = vunpack.c.l.b16 %v2185
    %v2203 = vpack.c.b16 %v2196, %v2195
    %v2204 = vpack.c.b16 %v2198, %v2197
    %v2205 = vpack.c.b16 %v2200, %v2199
    %v2206 = vpack.c.b16 %v2202, %v2201
    %v2212 = vsel %vm1603, %v2186, 0
    %2214 = vmatprep.subr.bf16.mxu0 0
    %2215 = vmatpush1.bf16.msra.mxu0 0
    %2216 = vmatprep.subr.bf16.mxu0 0
    %2217 = vmatpush1.bf16.msra.mxu0 0
    %2218 = vmatprep.subr.bf16.mxu0 0
    %2219 = vmatpush1.bf16.msra.mxu0 0
    %2220 = vmatprep.subr.bf16.mxu0 0
    %2221 = vmatpush1.bf16.msra.mxu0 0
    %2222 = vmatprep.subr.bf16.mxu0 0
    %2223 = vmatpush1.bf16.msra.mxu0 %v2206
    %2224 = vmatprep.subr.bf16.mxu0 0
    %2225 = vmatpush1.bf16.msra.mxu0 %v2205
    %2226 = vmatprep.subr.bf16.mxu0 0
    %2227 = vmatpush1.bf16.msra.mxu0 %v2204
    %2228 = vmatprep.subr.bf16.mxu0 0
    %2229 = vmatpush1.bf16.msra.mxu0 %v2203
    %2230 = vmatprep.subr.bf16.mxu0 0
    %2231 = vmatpush2.bf16.msra.mxu0 0
    %2232 = vmatprep.subr.bf16.mxu0 0
    %2233 = vmatpush2.bf16.msra.mxu0 0
    %2234 = vmatprep.subr.bf16.mxu0 0
    %2235 = vmatpush2.bf16.msra.mxu0 0
    %2236 = vmatprep.subr.bf16.mxu0 0
    %2237 = vmatpush2.bf16.msra.mxu0 0
    %2238 = vmatprep.subr.bf16.mxu0 0
    %2239 = vmatpush2.bf16.msra.mxu0 0
    %2240 = vmatprep.subr.bf16.mxu0 0
    %2241 = vmatpush2.bf16.msra.mxu0 0
    %2242 = vmatprep.subr.bf16.mxu0 0
    %2243 = vmatpush2.bf16.msra.mxu0 0
    %2244 = vmatprep.subr.bf16.mxu0 0
    %2245 = vmatpush2.bf16.msra.mxu0 0
    %2246 = vmatprep.mubr.bf16.mxu0 0
    %2247 = vmatmul.mubr.bf16.gmra.mxu0 %v2212
    %v2248 = vpop.f32.mrf.mxu0
    %v2249 = vadd.f32 0.0, %v2248
    %v2250 = vpop.f32.mrf.mxu0
    %v2251 = vpop.f32.mrf.mxu0
    %v2252 = vpop.f32.mrf.mxu0
    %2253 = vdwg.mxu0
    %v2254 = vadd.f32 %v2177, %v2249
    %s2255 = sld [smem:[#allocation2]]
    %v2257 = vrot.slane %v44, 2
    %v2259 = vadd.f32 %v2254, %v2257
    %v2260 = vstv %s2255
    %v2261 = vmul.f32 %v2260, %v44
    %v2263 = vrot.slane %v2261, 3
    %v2265 = vadd.f32 %v2259, %v2263
    %v2266 = vmax.f32 %v2265, 0.0
    %v2267 = vrot.slane %v44, 4
    %2268 = vrot.lane.b32.xlu0 %v2267, 64
    %v2269 = vpop.permute.xlu0 %2268
    %v2271 = vadd.f32 %v2254, %v2269
    %v2272 = vrot.slane %v2261, 6
    %2273 = vrot.lane.b32.xlu0 %v2272, 64
    %v2274 = vpop.permute.xlu0 %2273
    %v2276 = vadd.f32 %v2271, %v2274
    %v2277 = vcvt.s32.f32 %v532
    %v2278 = vlaneseq
    %v2279 = vshrl.u32 %v2278, 7
    %v2280 = vsub.s32 5, %v2279
    %v2281 = vrot.slane %v44, %v2280
    %v2282 = vmul.f32 %v2277, %v2281
    %v2283 = vlaneseq
    %v2284 = vshrl.u32 %v2283, 7
    %v2285 = vsub.s32 0, %v2284
    %v2286 = vrot.slane %v2276, %v2285
    %2288 = vrot.lane.b32.xlu0 %v2282, 64
    %v2289 = vpop.permute.xlu0 %2288
    %v2291 = vadd.f32 %v2286, %v2289
    %v2292 = vmax.f32 %v2291, 0.0
    %v2294 = vrot.slane %v2292, 7
    %2295 = vrot.lane.b32.xlu0 %v2294, 64
    %v2296 = vpop.permute.xlu0 %2295
    %vm2298 = vcmask 1040384
    %v2299 = vsel %vm2298, %v2266, %v2296
    %v2300 = vpack.c.bf16 %v2299, %v2299
    %v2301 = vlaneseq
    %v2302 = vshrl.u32 %v2301, 7
    %v2303 = vsub.s32 7, %v2302
    %v2304 = vrot.slane %v44, %v2303
    %v2313 = vunpack.c.l.b16 %v46
    %v2314 = vunpack.c.l.b16 %v47
    %v2315 = vunpack.c.l.b16 %v48
    %v2316 = vunpack.c.l.b16 %v49
    %v2317 = vunpack.c.l.b16 %v50
    %v2318 = vunpack.c.l.b16 %v51
    %v2319 = vunpack.c.l.b16 %v52
    %v2320 = vunpack.c.l.b16 %v53
    %v2321 = vpack.c.b16 %v2314, %v2313
    %v2322 = vpack.c.b16 %v2316, %v2315
    %v2323 = vpack.c.b16 %v2318, %v2317
    %v2324 = vpack.c.b16 %v2320, %v2319
    %v2330 = vsel %vm1603, %v2300, 0
    %2332 = vmatprep.subr.bf16.mxu0 0
    %2333 = vmatpush1.bf16.msra.mxu0 0
    %2334 = vmatprep.subr.bf16.mxu0 0
    %2335 = vmatpush1.bf16.msra.mxu0 0
    %2336 = vmatprep.subr.bf16.mxu0 0
    %2337 = vmatpush1.bf16.msra.mxu0 0
    %2338 = vmatprep.subr.bf16.mxu0 0
    %2339 = vmatpush1.bf16.msra.mxu0 0
    %2340 = vmatprep.subr.bf16.mxu0 0
    %2341 = vmatpush1.bf16.msra.mxu0 %v2324
    %2342 = vmatprep.subr.bf16.mxu0 0
    %2343 = vmatpush1.bf16.msra.mxu0 %v2323
    %2344 = vmatprep.subr.bf16.mxu0 0
    %2345 = vmatpush1.bf16.msra.mxu0 %v2322
    %2346 = vmatprep.subr.bf16.mxu0 0
    %2347 = vmatpush1.bf16.msra.mxu0 %v2321
    %2348 = vmatprep.subr.bf16.mxu0 0
    %2349 = vmatpush2.bf16.msra.mxu0 0
    %2350 = vmatprep.subr.bf16.mxu0 0
    %2351 = vmatpush2.bf16.msra.mxu0 0
    %2352 = vmatprep.subr.bf16.mxu0 0
    %2353 = vmatpush2.bf16.msra.mxu0 0
    %2354 = vmatprep.subr.bf16.mxu0 0
    %2355 = vmatpush2.bf16.msra.mxu0 0
    %2356 = vmatprep.subr.bf16.mxu0 0
    %2357 = vmatpush2.bf16.msra.mxu0 0
    %2358 = vmatprep.subr.bf16.mxu0 0
    %2359 = vmatpush2.bf16.msra.mxu0 0
    %2360 = vmatprep.subr.bf16.mxu0 0
    %2361 = vmatpush2.bf16.msra.mxu0 0
    %2362 = vmatprep.subr.bf16.mxu0 0
    %2363 = vmatpush2.bf16.msra.mxu0 0
    %2364 = vmatprep.mubr.bf16.mxu0 0
    %2365 = vmatmul.mubr.bf16.gmra.mxu0 %v2330
    %v2366 = vpop.f32.mrf.mxu0
    %v2367 = vadd.f32 %v2304, %v2366
    %v2368 = vpop.f32.mrf.mxu0
    %v2369 = vpop.f32.mrf.mxu0
    %v2370 = vpop.f32.mrf.mxu0
    %2371 = vdwg.mxu0
    %v2372 = vmax.f32 %v2367, 0.0
    %v2373 = vpack.c.bf16 %v2372, %v2372
    %v2374 = vlaneseq
    %v2375 = vshrl.u32 %v2374, 7
    %v2376 = vsub.s32 0, %v2375
    %v2377 = vrot.slane %v45, %v2376
    %2378 = vrot.lane.b32.xlu0 %v2321, 64
    %v2379 = vpop.permute.xlu0 %2378
    %2380 = vrot.lane.b32.xlu0 %v2322, 64
    %v2381 = vpop.permute.xlu0 %2380
    %2382 = vrot.lane.b32.xlu0 %v2323, 64
    %v2383 = vpop.permute.xlu0 %2382
    %2384 = vrot.lane.b32.xlu0 %v2324, 64
    %v2385 = vpop.permute.xlu0 %2384
    %v2391 = vsel %vm1603, %v2373, 0
    %2393 = vmatprep.subr.bf16.mxu0 0
    %2394 = vmatpush1.bf16.msra.mxu0 0
    %2395 = vmatprep.subr.bf16.mxu0 0
    %2396 = vmatpush1.bf16.msra.mxu0 0
    %2397 = vmatprep.subr.bf16.mxu0 0
    %2398 = vmatpush1.bf16.msra.mxu0 0
    %2399 = vmatprep.subr.bf16.mxu0 0
    %2400 = vmatpush1.bf16.msra.mxu0 0
    %2401 = vmatprep.subr.bf16.mxu0 0
    %2402 = vmatpush1.bf16.msra.mxu0 %v2385
    %2403 = vmatprep.subr.bf16.mxu0 0
    %2404 = vmatpush1.bf16.msra.mxu0 %v2383
    %2405 = vmatprep.subr.bf16.mxu0 0
    %2406 = vmatpush1.bf16.msra.mxu0 %v2381
    %2407 = vmatprep.subr.bf16.mxu0 0
    %2408 = vmatpush1.bf16.msra.mxu0 %v2379
    %2409 = vmatprep.subr.bf16.mxu0 0
    %2410 = vmatpush2.bf16.msra.mxu0 0
    %2411 = vmatprep.subr.bf16.mxu0 0
    %2412 = vmatpush2.bf16.msra.mxu0 0
    %2413 = vmatprep.subr.bf16.mxu0 0
    %2414 = vmatpush2.bf16.msra.mxu0 0
    %2415 = vmatprep.subr.bf16.mxu0 0
    %2416 = vmatpush2.bf16.msra.mxu0 0
    %2417 = vmatprep.subr.bf16.mxu0 0
    %2418 = vmatpush2.bf16.msra.mxu0 0
    %2419 = vmatprep.subr.bf16.mxu0 0
    %2420 = vmatpush2.bf16.msra.mxu0 0
    %2421 = vmatprep.subr.bf16.mxu0 0
    %2422 = vmatpush2.bf16.msra.mxu0 0
    %2423 = vmatprep.subr.bf16.mxu0 0
    %2424 = vmatpush2.bf16.msra.mxu0 0
    %2425 = vmatprep.mubr.bf16.mxu0 0
    %2426 = vmatmul.mubr.bf16.gmra.mxu0 %v2391
    %v2427 = vpop.f32.mrf.mxu0
    %v2428 = vadd.f32 %v2377, %v2427
    %v2429 = vpop.f32.mrf.mxu0
    %v2430 = vpop.f32.mrf.mxu0
    %v2431 = vpop.f32.mrf.mxu0
    %2432 = vdwg.mxu0
    %vm2433 = vcmask 24576
    %v2434 = vsel %vm2433, %v2428, -inf
    %2435 = vmax.xlane.f32.xlu0 %v2434
    %v2436 = vpop.xlane.xlu0 %2435
    %v2437 = vsub.f32 %v2428, %v2436
    %v2438 = vmul.f32 %v2437, 1.442695
    %v2439 = vpow.pop %v2438
    %v2440 = vsel %vm2433, %v2439, 0.0
    %2441 = vadd.xlane.f32.xlu0 %v2440
    %v2442 = vpop.xlane.xlu0 %2441
    %v2443 = vlog2.pop %v2442
    %v2444 = vmul.f32 %v2443, 0.6931472
    %v2445 = vsub.f32 %v2437, %v2444
    %v2446 = vmul.f32 %v2439, %v2437
    %v2447 = vsel %vm2433, %v2446, 0.0
    %2448 = vadd.xlane.f32.xlu0 %v2447
    %v2449 = vpop.xlane.xlu0 %2448
    %v2450 = vrcp.pop %v2442
    %v2451 = vmul.f32 %v2449, %v2450
    %v2452 = vsub.f32 %v2444, %v2451
    %v2453 = vadd.f32 %v2445, %v81
    %v2454 = vsel %vm2433, %v2453, -inf
    %2455 = vmax.xlane.f32.xlu0 %v2454
    %v2456 = vpop.xlane.xlu0 %2455
    %v2457 = vcvt.s32.f32 %v57
    %vm2458 = vcmp.ge.f32.partialorder %v2453, %v2456
    %v2459 = vsel %vm2458, %v2457, 1e+09
    %v2460 = vsel %vm2433, %v2459, inf
    %2461 = vmin.xlane.f32.xlu0 %v2460
    %v2462 = vpop.xlane.xlu0 %2461
    %vm2463 = vcmp.eq.f32.partialorder %v2457, %v2462
    %v2464 = vsel %vm2463, %v2445, 0.0
    %v2465 = vsel %vm2433, %v2464, 0.0
    %2466 = vadd.xlane.f32.xlu0 %v2465
    %v2467 = vpop.xlane.xlu0 %2466
    %v2468 = vlaneseq
    %v2469 = vshrl.u32 %v2468, 7
    %v2470 = vsub.s32 0, %v2469
    %v2471 = vrot.slane %v2462, %v2470
    %vm2472 = vcmp.eq.f32.partialorder %v2277, %v2471
    %v2474 = vrot.slane %v2428, 1
    %2475 = vrot.lane.b32.xlu0 %v2474, 124
    %v2476 = vpop.permute.xlu0 %2475
    %v2478 = vsel %vm2472, %v2476, 0.0
    %vm2479 = vcmask 3072
    %v2480 = vsel %vm2479, %v2478, 0.0
    %v2481 = vrot.slane %v2480, 4
    %v2482 = vadd.f32 %v2480, %v2481
    %v2483 = vrot.slane %v2482, 2
    %v2484 = vadd.f32 %v2482, %v2483
    %v2485 = vrot.slane %v2484, 1
    %v2486 = vadd.f32 %v2484, %v2485
    %2488 = vrot.lane.b32.xlu0 %v2486, 2
    %v2489 = vpop.permute.xlu0 %2488
    %vm2491 = vcmask 7168
    %v2492 = vsel %vm2491, %v2462, %v2467
    %vm2493 = vcmask 15360
    %v2494 = vsel %vm2493, %v2492, %v2489
    %vm2495 = vcmask 23552
    %v2496 = vsel %vm2495, %v2494, %v2452
    %vm2497 = vcmask 31744
    %v2498 = vsel %vm2497, %v2496, 0.0
    %vm2499 = vcmask 57344
    %2500 = vst.msk [vmem:[%s8] sm:$0x1] %vm2499, %v2498
    // Predicated region
    $region38: #{forward.1} parent=1 // pred_check
      _
    $region39: #{forward.1} parent=1 // pred_check_branch
      %2502 = sbr.rel (0) target = $region41
    $region40: #{forward.1} parent=1 // pred_region
      _
    $region41: #{forward.1} parent=1 // pred_fallthru
      _
    // Predicated region
    $region42: #{forward.1} parent=1 // pred_check
      _
    $region43: #{forward.1} parent=1 // pred_check_branch
      %2504 = sbr.rel (0) target = $region45
    $region44: #{forward.1} parent=1 // pred_region
      _
    $region45: #{forward.1} parent=1 // pred_fallthru
      _
    %2505 = vsyncpa [#allocation4], 1

</llo_original>
